<compile_context>
chip_gen: v7x
topology: tpu7x:2x2x1
jax: 0.10.0
libtpu: 0.0.40
codegen_flags: <defaults>
</compile_context>

<pallas_src>
from functools import partial

import jax
import jax.numpy as jnp
import numpy as np
from jax.experimental import pallas as pl
from jax.experimental.pallas import tpu as pltpu

SELF_LOOP_FILL = 3.0
LANE = 128
SUBLANE = 8

_VMEM_BUDGET = None  # lazily derived per chip


def _round_up(x, m):
    return (x + m - 1) // m * m


def _vmem_budget_bytes():
    """Per-chip VMEM budget (bytes) with compiler headroom."""
    global _VMEM_BUDGET
    if _VMEM_BUDGET is None:
        try:
            info = pltpu.get_tpu_info()
            cap = int(getattr(info, "vmem_capacity_bytes", 64 * 1024 * 1024))
        except Exception:
            cap = 64 * 1024 * 1024  # conservative: v7x has 64 MiB / TC
        # 3/4 of physical, capped at 100 MiB (v5e/v6e have 128 MiB physical).
        _VMEM_BUDGET = int(min(cap * 3 // 4, 100 * 1024 * 1024))
    return _VMEM_BUDGET


def _divisor_tile(n, ladder=(512, 256, 128, 64, 32, 16, 8)):
    for c in ladder:
        if c <= n and n % c == 0:
            return c
    return n


def _two_pass_vmem_bytes(tm, tk, in_ft, out_pad):
    bf, f32 = 2, 4
    # pass 1: seq(2x), wt(2x), adj(2x), hd out(2x), deg scratch + f32 sum temp
    p1 = (2 * tm * in_ft * bf + 2 * in_ft * out_pad * bf + 2 * tm * tk * bf
          + 2 * tm * out_pad * bf + tm * f32 + tm * tk * f32)
    # pass 2: adj(2x), hd_k(2x), hd_i(2x), out(2x f32), acc, deg, f32 sum temp
    p2 = (2 * tm * tk * bf + 2 * tk * out_pad * bf + 2 * tm * out_pad * bf
          + 2 * tm * out_pad * f32 + tm * out_pad * f32 + tm * f32
          + tm * tk * f32)
    return max(p1, p2)


def _fused_vmem_bytes(n, in_ft, out_pad):
    bf, f32 = 2, 4
    # be conservative: assume double-buffered inputs + f32 temporaries.
    return (2 * (n * n * bf + n * in_ft * bf + in_ft * out_pad * bf)
            + 2 * n * out_pad * f32 + 3 * n * out_pad * f32 + n * n * f32)


def prepare_weight(w, out_pad=None, dtype=jnp.bfloat16):
    """torch Linear weight [out_ft, in_ft] -> pre-transposed, lane-padded,
    bf16 [in_ft, out_pad].  Done once at parameter-init time."""
    out_ft, in_ft = w.shape
    if out_pad is None:
        out_pad = _round_up(out_ft, LANE)
    wt = jnp.zeros((in_ft, out_pad), dtype)
    return wt.at[:, :out_ft].set(w.T.astype(dtype))


# ---------------------------------------------------------------------------
# Pass 1 (K-tiled): accumulate deg over column tiles; at the last k compute
# h = seq @ Wt (MXU, f32 acc), d = rsqrt(deg + 3), store hd = d ⊙ h in bf16.
# ---------------------------------------------------------------------------
def _gcn_prep_kernel(seq_ref, wt_ref, adj_ref, hd_ref, deg_ref):
    k = pl.program_id(1)

    @pl.when(k == 0)
    def _():
        deg_ref[...] = jnp.zeros_like(deg_ref)

    deg_ref[...] += jnp.sum(adj_ref[...].astype(jnp.float32), axis=1,
                            keepdims=True)

    @pl.when(k == pl.num_programs(1) - 1)
    def _():
        h = jnp.dot(seq_ref[...], wt_ref[...],
                    preferred_element_type=jnp.float32)      # [tm, out_pad]
        deg = deg_ref[...] + SELF_LOOP_FILL
        # deg^-0.5 with inf (deg == 0) masked to 0, matching masked_fill_.
        d = jnp.where(deg > 0.0, jax.lax.rsqrt(deg), 0.0)    # [tm, 1]
        hd_ref[...] = (d * h).astype(hd_ref.dtype)


# ---------------------------------------------------------------------------
# Pass 2 (K-tiled): acc += adj[i,k] @ hd[k]; deg accumulated across k; at the
# last k: out = relu( d ⊙ (acc + 3·hd_i) ).
# ---------------------------------------------------------------------------
def _gcn_prop_kernel(adj_ref, hd_k_ref, hd_i_ref, out_ref, acc_ref, deg_ref):
    k = pl.program_id(1)

    @pl.when(k == 0)
    def _():
        acc_ref[...] = jnp.zeros_like(acc_ref)
        deg_ref[...] = jnp.zeros_like(deg_ref)

    adj = adj_ref[...]                                        # [tm, tk] bf16
    deg_ref[...] += jnp.sum(adj.astype(jnp.float32), axis=1, keepdims=True)
    acc_ref[...] += jnp.dot(adj, hd_k_ref[...],
                            preferred_element_type=jnp.float32)

    @pl.when(k == pl.num_programs(1) - 1)
    def _():
        deg = deg_ref[...] + SELF_LOOP_FILL
        d = jnp.where(deg > 0.0, jax.lax.rsqrt(deg), 0.0)     # [tm, 1]
        out = d * (acc_ref[...]
                   + SELF_LOOP_FILL * hd_i_ref[...].astype(jnp.float32))
        out_ref[...] = jnp.maximum(out, 0.0).astype(out_ref.dtype)   # relu


# ---------------------------------------------------------------------------
# Fused single-call path (small graphs, everything VMEM-resident): adjacency
# is read from HBM exactly once, no hd round-trip.
# ---------------------------------------------------------------------------
def _gcn_fused_kernel(seq_ref, wt_ref, adj_ref, out_ref):
    adj = adj_ref[...]                                        # [n, n] bf16
    deg = jnp.sum(adj.astype(jnp.float32), axis=1, keepdims=True) + SELF_LOOP_FILL
    d = jnp.where(deg > 0.0, jax.lax.rsqrt(deg), 0.0)         # [n, 1]
    h = jnp.dot(seq_ref[...], wt_ref[...],
                preferred_element_type=jnp.float32)           # [n, out_pad]
    hd = d * h
    agg = jnp.dot(adj, hd.astype(jnp.bfloat16),
                  preferred_element_type=jnp.float32)
    out = d * (agg + SELF_LOOP_FILL * hd)
    out_ref[...] = jnp.maximum(out, 0.0).astype(out_ref.dtype)


@partial(jax.jit, static_argnames=("out_ft", "tm", "tk", "vmem_limit"))
def _gcn_forward_two_pass(seq, adj, wt_pad, *, out_ft, tm, tk, vmem_limit):
    n, in_ft = seq.shape
    out_pad = wt_pad.shape[1]

    seq = seq.astype(jnp.bfloat16)
    adj = adj.astype(jnp.bfloat16)
    wt = wt_pad.astype(jnp.bfloat16)

    cparams = pltpu.CompilerParams(
        dimension_semantics=("parallel", "arbitrary"),
        vmem_limit_bytes=vmem_limit,
    )
    grid = (n // tm, n // tk)

    hd = pl.pallas_call(
        _gcn_prep_kernel,
        out_shape=jax.ShapeDtypeStruct((n, out_pad), jnp.bfloat16),
        grid_spec=pltpu.PrefetchScalarGridSpec(
            num_scalar_prefetch=0,
            grid=grid,
            in_specs=[
                pl.BlockSpec((tm, in_ft), lambda i, k: (i, 0)),
                pl.BlockSpec((in_ft, out_pad), lambda i, k: (0, 0)),  # resident
                pl.BlockSpec((tm, tk), lambda i, k: (i, k)),
            ],
            out_specs=pl.BlockSpec((tm, out_pad), lambda i, k: (i, 0)),
            scratch_shapes=[pltpu.VMEM((tm, 1), jnp.float32)],
        ),
        compiler_params=cparams,
    )(seq, wt, adj)

    out_padded = pl.pallas_call(
        _gcn_prop_kernel,
        out_shape=jax.ShapeDtypeStruct((n, out_pad), jnp.float32),
        grid_spec=pltpu.PrefetchScalarGridSpec(
            num_scalar_prefetch=0,
            grid=grid,
            in_specs=[
                pl.BlockSpec((tm, tk), lambda i, k: (i, k)),        # adj tile
                pl.BlockSpec((tk, out_pad), lambda i, k: (k, 0)),   # hd[k]
                pl.BlockSpec((tm, out_pad), lambda i, k: (i, 0)),   # hd[i] (self-loop)
            ],
            out_specs=pl.BlockSpec((tm, out_pad), lambda i, k: (i, 0)),
            scratch_shapes=[
                pltpu.VMEM((tm, out_pad), jnp.float32),
                pltpu.VMEM((tm, 1), jnp.float32),
            ],
        ),
        compiler_params=cparams,
    )(adj, hd, hd)

    if out_pad != out_ft:            # skip the slice when already lane-aligned
        out_padded = out_padded[:, :out_ft]
    return out_padded


@partial(jax.jit, static_argnames=("out_ft", "vmem_limit"))
def _gcn_forward_fused(seq, adj, wt_pad, *, out_ft, vmem_limit):
    n, in_ft = seq.shape
    out_pad = wt_pad.shape[1]

    seq = seq.astype(jnp.bfloat16)
    adj = adj.astype(jnp.bfloat16)
    wt = wt_pad.astype(jnp.bfloat16)

    cparams = pltpu.CompilerParams(
        dimension_semantics=("arbitrary",),
        vmem_limit_bytes=vmem_limit,
    )

    out_padded = pl.pallas_call(
        _gcn_fused_kernel,
        out_shape=jax.ShapeDtypeStruct((n, out_pad), jnp.float32),
        grid_spec=pltpu.PrefetchScalarGridSpec(
            num_scalar_prefetch=0,
            grid=(1,),
            in_specs=[
                pl.BlockSpec((n, in_ft), lambda i: (0, 0)),
                pl.BlockSpec((in_ft, out_pad), lambda i: (0, 0)),
                pl.BlockSpec((n, n), lambda i: (0, 0)),
            ],
            out_specs=pl.BlockSpec((n, out_pad), lambda i: (0, 0)),
        ),
        compiler_params=cparams,
    )(seq, wt, adj)

    if out_pad != out_ft:
        out_padded = out_padded[:, :out_ft]
    return out_padded


def gcn_forward(seq, wt_pad, adj, out_ft, tm=None, tk=None, fuse=None):
    """seq: [N, in_ft], wt_pad: [in_ft, out_pad] (from prepare_weight),
    adj: dense [N, N] (caller should pre-cast to bf16 for repeated use).
    Returns [N, out_ft] float32."""
    n, in_ft = seq.shape
    out_pad = wt_pad.shape[1]
    budget = _vmem_budget_bytes()

    if fuse is None:
        fuse = _fused_vmem_bytes(n, in_ft, out_pad) <= budget // 2
    if fuse:
        return _gcn_forward_fused(seq, adj, wt_pad, out_ft=out_ft,
                                  vmem_limit=budget)

    if tm is None:
        tm = _divisor_tile(n)
    if tk is None:
        tk = _divisor_tile(n)

    def _fits(a, b):
        return _two_pass_vmem_bytes(a, b, in_ft, out_pad) <= budget

    while not _fits(tm, tk) and tk > 128 and n % (tk // 2) == 0:
        tk //= 2
    while not _fits(tm, tk) and tm > 128 and n % (tm // 2) == 0:
        tm //= 2

    assert n % tm == 0 and n % tk == 0, "demo requires N % tm == 0 and N % tk == 0"
    assert tm % SUBLANE == 0 and tk % SUBLANE == 0, "tiles must be multiples of 8"

    return _gcn_forward_two_pass(seq, adj, wt_pad, out_ft=out_ft,
                                 tm=tm, tk=tk, vmem_limit=budget)


def _reference(seq, w, adj):
    n = adj.shape[0]
    a = adj + SELF_LOOP_FILL * jnp.eye(n, dtype=adj.dtype)
    deg = jnp.sum(a, axis=1, keepdims=True)
    d = jnp.where(deg > 0.0, deg ** -0.5, 0.0)
    a_norm = d * a * d.T
    return jnp.maximum(a_norm @ (seq @ w.T), 0.0)


def _make_inputs(key, n, in_ft, out_ft):
    k_seq, k_w, k_adj = jax.random.split(key, 3)
    seq = jax.random.normal(k_seq, (n, in_ft), dtype=jnp.float32)
    # xavier_uniform_ for nn.Linear(in_ft, out_ft, bias=False): [out_ft, in_ft]
    bound = float(np.sqrt(6.0 / (in_ft + out_ft)))
    w = jax.random.uniform(k_w, (out_ft, in_ft), dtype=jnp.float32,
                           minval=-bound, maxval=bound)
    # synthetic sparse-ish symmetric adjacency (dense representation), zero diag
    raw = jax.random.uniform(k_adj, (n, n), dtype=jnp.float32)
    adj = (raw > 0.7).astype(jnp.float32) * raw
    adj = jnp.maximum(adj, adj.T)
    adj = adj * (1.0 - jnp.eye(n, dtype=jnp.float32))
    return seq, w, adj


if __name__ == "__main__":
    key = jax.random.PRNGKey(0)
    k1, k2 = jax.random.split(key)
    # bf16 MXU inputs with f32 accumulation -> loose-ish tolerance vs f32 ref.
    RTOL, ATOL = 5e-2, 5e-3
    ok = True

    # (a) two-pass K-tiled path (forced): exercises the ("parallel",
    #     "arbitrary") grid, the f32 accumulator and the deg scratch.
    seq, w, adj = _make_inputs(k1, 256, 64, 96)
    wt_pad = prepare_weight(w)
    out = jax.block_until_ready(
        gcn_forward(seq, wt_pad, adj, 96, tm=128, tk=128, fuse=False))
    ref = _reference(seq, w, adj)
    ok = ok and bool(np.allclose(np.asarray(out), np.asarray(ref),
                                 rtol=RTOL, atol=ATOL))

    # (b) fused single-adjacency-read path for small graphs (forced).
    seq, w, adj = _make_inputs(k2, 128, 64, 96)
    wt_pad = prepare_weight(w)
    out = jax.block_until_ready(gcn_forward(seq, wt_pad, adj, 96, fuse=True))
    ref = _reference(seq, w, adj)
    ok = ok and bool(np.allclose(np.asarray(out), np.asarray(ref),
                                 rtol=RTOL, atol=ATOL))

    if not ok:
        raise AssertionError("Pallas GCN output mismatch vs reference")
    print("KERNEL_OK")
</pallas_src>

<mosaic_0001>
module attributes {stable_mosaic.version = 11 : i64} {
  func.func @_gcn_prep_kernel(%arg0: i32, %arg1: i32, %arg2: memref<128x64xbf16, #tpu.memory_space<vmem>>, %arg3: memref<64x128xbf16, #tpu.memory_space<vmem>>, %arg4: memref<128x128xbf16, #tpu.memory_space<vmem>>, %arg5: memref<128x128xbf16, #tpu.memory_space<vmem>>, %arg6: memref<128x1xf32, #tpu.memory_space<vmem>>) attributes {dimension_semantics = [#tpu.dimension_semantics<parallel>, #tpu.dimension_semantics<arbitrary>], iteration_bounds = array<i64: 2, 2>, scalar_prefetch = 0 : i64, scratch_operands = 1 : i64, tpu.core_type = #tpu.core_type<tc>, window_params = [{transform_indices = @transform_0, window_bounds = array<i64: 128, 64>}, {pipeline_mode = #tpu.pipeline_mode<synchronous>, transform_indices = @transform_1, window_bounds = array<i64: 64, 128>}, {transform_indices = @transform_2, window_bounds = array<i64: 128, 128>}, {transform_indices = @transform_3, window_bounds = array<i64: 128, 128>}]} {
    %c0_i32 = arith.constant 0 : i32
    %0 = arith.cmpi eq, %arg1, %c0_i32 : i32
    %1 = arith.extui %0 : i1 to i32
    %c0_i32_0 = arith.constant 0 : i32
    %2 = arith.cmpi ne, %1, %c0_i32_0 : i32
    scf.if %2 {
      %cst_7 = arith.constant 0.000000e+00 : f32
      %13 = vector.broadcast %cst_7 : f32 to vector<128x1xf32>
      %c0_8 = arith.constant 0 : index
      %c0_9 = arith.constant 0 : index
      %14 = vector.load %arg6[%c0_8, %c0_9] : memref<128x1xf32, #tpu.memory_space<vmem>>, vector<128x1xf32>
      tpu.vector_store %arg6[%c0_8, %c0_9], %13 {strides = array<i32>} : memref<128x1xf32, #tpu.memory_space<vmem>>, vector<128x1xf32>,
    } else {
    }
    %c0 = arith.constant 0 : index
    %c0_1 = arith.constant 0 : index
    %3 = vector.load %arg6[%c0, %c0_1] : memref<128x1xf32, #tpu.memory_space<vmem>>, vector<128x1xf32>
    %c0_2 = arith.constant 0 : index
    %c0_3 = arith.constant 0 : index
    %4 = vector.load %arg4[%c0_2, %c0_3] : memref<128x128xbf16, #tpu.memory_space<vmem>>, vector<128x128xbf16>
    %5 = arith.extf %4 : vector<128x128xbf16> to vector<128x128xf32>
    %cst = arith.constant dense<0.000000e+00> : vector<128xf32>
    %6 = vector.multi_reduction <add>, %5, %cst [1] : vector<128x128xf32> to vector<128xf32>
    %7 = vector.shape_cast %6 : vector<128xf32> to vector<128x1xf32>
    %8 = arith.addf %3, %7 : vector<128x1xf32>
    %c0_4 = arith.constant 0 : index
    %c0_5 = arith.constant 0 : index
    %9 = vector.load %arg6[%c0_4, %c0_5] : memref<128x1xf32, #tpu.memory_space<vmem>>, vector<128x1xf32>
    tpu.vector_store %arg6[%c0_4, %c0_5], %8 {strides = array<i32>} : memref<128x1xf32, #tpu.memory_space<vmem>>, vector<128x1xf32>,
    %c1_i32 = arith.constant 1 : i32
    %10 = arith.cmpi eq, %arg1, %c1_i32 : i32
    %11 = arith.extui %10 : i1 to i32
    %c0_i32_6 = arith.constant 0 : i32
    %12 = arith.cmpi ne, %11, %c0_i32_6 : i32
    scf.if %12 {
      %c0_7 = arith.constant 0 : index
      %c0_8 = arith.constant 0 : index
      %13 = vector.load %arg2[%c0_7, %c0_8] : memref<128x64xbf16, #tpu.memory_space<vmem>>, vector<128x64xbf16>
      %c0_9 = arith.constant 0 : index
      %c0_10 = arith.constant 0 : index
      %14 = vector.load %arg3[%c0_9, %c0_10] : memref<64x128xbf16, #tpu.memory_space<vmem>>, vector<64x128xbf16>
      %cst_11 = arith.constant dense<0.000000e+00> : vector<128x128xf32>
      %15 = tpu.matmul %13, %14, %cst_11 {dimension_numbers = #tpu.dot_dimension_numbers<[1], [0], [0], [1], [0, 0, 1, 1], [], []>} : vector<128x64xbf16>, vector<64x128xbf16>, vector<128x128xf32> -> vector<128x128xf32>
      %c0_12 = arith.constant 0 : index
      %c0_13 = arith.constant 0 : index
      %16 = vector.load %arg6[%c0_12, %c0_13] : memref<128x1xf32, #tpu.memory_space<vmem>>, vector<128x1xf32>
      %cst_14 = arith.constant 3.000000e+00 : f32
      %17 = vector.broadcast %cst_14 : f32 to vector<128x1xf32>
      %18 = arith.addf %16, %17 : vector<128x1xf32>
      %cst_15 = arith.constant 0.000000e+00 : f32
      %19 = vector.broadcast %cst_15 : f32 to vector<128x1xf32>
      %20 = arith.cmpf ogt, %18, %19 : vector<128x1xf32>
      %21 = math.rsqrt %18 : vector<128x1xf32>
      %cst_16 = arith.constant 0.000000e+00 : f32
      %22 = vector.broadcast %cst_16 : f32 to vector<128x1xf32>
      %23 = arith.select %20, %21, %22 : vector<128x1xi1>, vector<128x1xf32>
      %24 = vector.broadcast %23 : vector<128x1xf32> to vector<128x128xf32>
      %25 = arith.mulf %24, %15 : vector<128x128xf32>
      %26 = arith.truncf %25 : vector<128x128xf32> to vector<128x128xbf16>
      %c0_17 = arith.constant 0 : index
      %c0_18 = arith.constant 0 : index
      %27 = vector.load %arg5[%c0_17, %c0_18] : memref<128x128xbf16, #tpu.memory_space<vmem>>, vector<128x128xbf16>
      tpu.vector_store %arg5[%c0_17, %c0_18], %26 {strides = array<i32>} : memref<128x128xbf16, #tpu.memory_space<vmem>>, vector<128x128xbf16>,
    } else {
    }
    return
  }
  func.func @transform_0(%arg0: i32, %arg1: i32) -> (i32, i32) {
    %c0_i32 = arith.constant 0 : i32
    %c0_i32_0 = arith.constant 0 : i32
    return %arg0, %c0_i32 : i32, i32
  }
  func.func @transform_1(%arg0: i32, %arg1: i32) -> (i32, i32) {
    %c0_i32 = arith.constant 0 : i32
    %c0_i32_0 = arith.constant 0 : i32
    %c0_i32_1 = arith.constant 0 : i32
    return %c0_i32, %c0_i32_0 : i32, i32
  }
  func.func @transform_2(%arg0: i32, %arg1: i32) -> (i32, i32) {
    %c0_i32 = arith.constant 0 : i32
    return %arg0, %arg1 : i32, i32
  }
  func.func @transform_3(%arg0: i32, %arg1: i32) -> (i32, i32) {
    %c0_i32 = arith.constant 0 : i32
    %c0_i32_0 = arith.constant 0 : i32
    return %arg0, %c0_i32 : i32, i32
  }
}

module attributes {stable_mosaic.version = 11 : i64} {
  func.func @_gcn_prop_kernel(%arg0: i32, %arg1: i32, %arg2: memref<128x128xbf16, #tpu.memory_space<vmem>>, %arg3: memref<128x128xbf16, #tpu.memory_space<vmem>>, %arg4: memref<128x128xbf16, #tpu.memory_space<vmem>>, %arg5: memref<128x128xf32, #tpu.memory_space<vmem>>, %arg6: memref<128x128xf32, #tpu.memory_space<vmem>>, %arg7: memref<128x1xf32, #tpu.memory_space<vmem>>) attributes {dimension_semantics = [#tpu.dimension_semantics<parallel>, #tpu.dimension_semantics<arbitrary>], iteration_bounds = array<i64: 2, 2>, scalar_prefetch = 0 : i64, scratch_operands = 2 : i64, tpu.core_type = #tpu.core_type<tc>, window_params = [{transform_indices = @transform_0, window_bounds = array<i64: 128, 128>}, {transform_indices = @transform_1, window_bounds = array<i64: 128, 128>}, {transform_indices = @transform_2, window_bounds = array<i64: 128, 128>}, {transform_indices = @transform_3, window_bounds = array<i64: 128, 128>}]} {
    %c0_i32 = arith.constant 0 : i32
    %0 = arith.cmpi eq, %arg1, %c0_i32 : i32
    %1 = arith.extui %0 : i1 to i32
    %c0_i32_0 = arith.constant 0 : i32
    %2 = arith.cmpi ne, %1, %c0_i32_0 : i32
    scf.if %2 {
      %cst_14 = arith.constant 0.000000e+00 : f32
      %18 = vector.broadcast %cst_14 : f32 to vector<128x128xf32>
      %c0_15 = arith.constant 0 : index
      %c0_16 = arith.constant 0 : index
      %19 = vector.load %arg6[%c0_15, %c0_16] : memref<128x128xf32, #tpu.memory_space<vmem>>, vector<128x128xf32>
      tpu.vector_store %arg6[%c0_15, %c0_16], %18 {strides = array<i32>} : memref<128x128xf32, #tpu.memory_space<vmem>>, vector<128x128xf32>,
      %cst_17 = arith.constant 0.000000e+00 : f32
      %20 = vector.broadcast %cst_17 : f32 to vector<128x1xf32>
      %c0_18 = arith.constant 0 : index
      %c0_19 = arith.constant 0 : index
      %21 = vector.load %arg7[%c0_18, %c0_19] : memref<128x1xf32, #tpu.memory_space<vmem>>, vector<128x1xf32>
      tpu.vector_store %arg7[%c0_18, %c0_19], %20 {strides = array<i32>} : memref<128x1xf32, #tpu.memory_space<vmem>>, vector<128x1xf32>,
    } else {
    }
    %c0 = arith.constant 0 : index
    %c0_1 = arith.constant 0 : index
    %3 = vector.load %arg2[%c0, %c0_1] : memref<128x128xbf16, #tpu.memory_space<vmem>>, vector<128x128xbf16>
    %c0_2 = arith.constant 0 : index
    %c0_3 = arith.constant 0 : index
    %4 = vector.load %arg7[%c0_2, %c0_3] : memref<128x1xf32, #tpu.memory_space<vmem>>, vector<128x1xf32>
    %5 = arith.extf %3 : vector<128x128xbf16> to vector<128x128xf32>
    %cst = arith.constant dense<0.000000e+00> : vector<128xf32>
    %6 = vector.multi_reduction <add>, %5, %cst [1] : vector<128x128xf32> to vector<128xf32>
    %7 = vector.shape_cast %6 : vector<128xf32> to vector<128x1xf32>
    %8 = arith.addf %4, %7 : vector<128x1xf32>
    %c0_4 = arith.constant 0 : index
    %c0_5 = arith.constant 0 : index
    %9 = vector.load %arg7[%c0_4, %c0_5] : memref<128x1xf32, #tpu.memory_space<vmem>>, vector<128x1xf32>
    tpu.vector_store %arg7[%c0_4, %c0_5], %8 {strides = array<i32>} : memref<128x1xf32, #tpu.memory_space<vmem>>, vector<128x1xf32>,
    %c0_6 = arith.constant 0 : index
    %c0_7 = arith.constant 0 : index
    %10 = vector.load %arg6[%c0_6, %c0_7] : memref<128x128xf32, #tpu.memory_space<vmem>>, vector<128x128xf32>
    %c0_8 = arith.constant 0 : index
    %c0_9 = arith.constant 0 : index
    %11 = vector.load %arg3[%c0_8, %c0_9] : memref<128x128xbf16, #tpu.memory_space<vmem>>, vector<128x128xbf16>
    %cst_10 = arith.constant dense<0.000000e+00> : vector<128x128xf32>
    %12 = tpu.matmul %3, %11, %cst_10 {dimension_numbers = #tpu.dot_dimension_numbers<[1], [0], [0], [1], [0, 0, 1, 1], [], []>} : vector<128x128xbf16>, vector<128x128xbf16>, vector<128x128xf32> -> vector<128x128xf32>
    %13 = arith.addf %10, %12 : vector<128x128xf32>
    %c0_11 = arith.constant 0 : index
    %c0_12 = arith.constant 0 : index
    %14 = vector.load %arg6[%c0_11, %c0_12] : memref<128x128xf32, #tpu.memory_space<vmem>>, vector<128x128xf32>
    tpu.vector_store %arg6[%c0_11, %c0_12], %13 {strides = array<i32>} : memref<128x128xf32, #tpu.memory_space<vmem>>, vector<128x128xf32>,
    %c1_i32 = arith.constant 1 : i32
    %15 = arith.cmpi eq, %arg1, %c1_i32 : i32
    %16 = arith.extui %15 : i1 to i32
    %c0_i32_13 = arith.constant 0 : i32
    %17 = arith.cmpi ne, %16, %c0_i32_13 : i32
    scf.if %17 {
      %c0_14 = arith.constant 0 : index
      %c0_15 = arith.constant 0 : index
      %18 = vector.load %arg7[%c0_14, %c0_15] : memref<128x1xf32, #tpu.memory_space<vmem>>, vector<128x1xf32>
      %cst_16 = arith.constant 3.000000e+00 : f32
      %19 = vector.broadcast %cst_16 : f32 to vector<128x1xf32>
      %20 = arith.addf %18, %19 : vector<128x1xf32>
      %cst_17 = arith.constant 0.000000e+00 : f32
      %21 = vector.broadcast %cst_17 : f32 to vector<128x1xf32>
      %22 = arith.cmpf ogt, %20, %21 : vector<128x1xf32>
      %23 = math.rsqrt %20 : vector<128x1xf32>
      %cst_18 = arith.constant 0.000000e+00 : f32
      %24 = vector.broadcast %cst_18 : f32 to vector<128x1xf32>
      %25 = arith.select %22, %23, %24 : vector<128x1xi1>, vector<128x1xf32>
      %c0_19 = arith.constant 0 : index
      %c0_20 = arith.constant 0 : index
      %26 = vector.load %arg6[%c0_19, %c0_20] : memref<128x128xf32, #tpu.memory_space<vmem>>, vector<128x128xf32>
      %c0_21 = arith.constant 0 : index
      %c0_22 = arith.constant 0 : index
      %27 = vector.load %arg4[%c0_21, %c0_22] : memref<128x128xbf16, #tpu.memory_space<vmem>>, vector<128x128xbf16>
      %28 = arith.extf %27 : vector<128x128xbf16> to vector<128x128xf32>
      %cst_23 = arith.constant 3.000000e+00 : f32
      %29 = vector.broadcast %cst_23 : f32 to vector<128x128xf32>
      %30 = arith.mulf %29, %28 : vector<128x128xf32>
      %31 = arith.addf %26, %30 : vector<128x128xf32>
      %32 = vector.broadcast %25 : vector<128x1xf32> to vector<128x128xf32>
      %33 = arith.mulf %32, %31 : vector<128x128xf32>
      %cst_24 = arith.constant 0.000000e+00 : f32
      %34 = vector.broadcast %cst_24 : f32 to vector<128x128xf32>
      %35 = arith.maximumf %33, %34 : vector<128x128xf32>
      %c0_25 = arith.constant 0 : index
      %c0_26 = arith.constant 0 : index
      %36 = vector.load %arg5[%c0_25, %c0_26] : memref<128x128xf32, #tpu.memory_space<vmem>>, vector<128x128xf32>
      tpu.vector_store %arg5[%c0_25, %c0_26], %35 {strides = array<i32>} : memref<128x128xf32, #tpu.memory_space<vmem>>, vector<128x128xf32>,
    } else {
    }
    return
  }
  func.func @transform_0(%arg0: i32, %arg1: i32) -> (i32, i32) {
    %c0_i32 = arith.constant 0 : i32
    return %arg0, %arg1 : i32, i32
  }
  func.func @transform_1(%arg0: i32, %arg1: i32) -> (i32, i32) {
    %c0_i32 = arith.constant 0 : i32
    %c0_i32_0 = arith.constant 0 : i32
    return %arg1, %c0_i32 : i32, i32
  }
  func.func @transform_2(%arg0: i32, %arg1: i32) -> (i32, i32) {
    %c0_i32 = arith.constant 0 : i32
    %c0_i32_0 = arith.constant 0 : i32
    return %arg0, %c0_i32 : i32, i32
  }
  func.func @transform_3(%arg0: i32, %arg1: i32) -> (i32, i32) {
    %c0_i32 = arith.constant 0 : i32
    %c0_i32_0 = arith.constant 0 : i32
    return %arg0, %c0_i32 : i32, i32
  }
}

</mosaic_0001>

<llo_original>
// kernel: _gcn_forward_two_pass.2
$region0: #{_gcn_forward_two_pass.2}
  #allocation0 [shape = 'u32[]', space=smem, size = 0x4, offset = 0x4, fixed_abs, tag = 'smem constant byte address 0x4 - core index']
  #allocation1 [shape = 'u32[144,128]{1,0:T(1,128)}', space=vmem, size = 0x12000, scoped, tag = 'internal scratch']
  #allocation2 [shape = 'f32[128,1]{1,0:T(8,128)}', space=vmem, size = 0x10000, scoped, tag = 'scratch operand']
  %s0 = inlined_call_operand.vmem [shape: bf16[256,64], index: 0, kind: input, shape index: {}]
  %s1 = inlined_call_operand.vmem [shape: bf16[64,128], index: 1, kind: input, shape index: {}]
  %s2 = inlined_call_operand.vmem [shape: bf16[256,256], index: 2, kind: input, shape index: {}]
  %s3 = inlined_call_operand.vmem [shape: bf16[256,128], index: 3, kind: output, shape index: {}]
  %s4 = sld [smem:[#allocation0]]
  $region94: #{_gcn_forward_two_pass.2} parent=0
    _
  %s6 = ssub.s32 1, %s4
  %s7 = scalar_select 0, %s6, %s4
  $region1: #{_gcn_forward_two_pass.2} parent=0
    #allocation3 [shape = 'u8[65536]{0}', space=vmem, size = 0x10000, scoped, tag = 'input window, operand 2']
    loop: start=0, step=1, limit=6
    $region2: #{_gcn_forward_two_pass.2} parent=1 // loop_pre_header
      _
    $region3: #{_gcn_forward_two_pass.2} parent=1 // loop_header
      %s9 = sphi 0, %s13
      %p10 = scmp.ge.s32.totalorder %s9, 6
      %s16 = sphi 0, %s28
      %s17 = sphi 0, %s24
      %s18 = sphi 0, %s16
      %s19 = sphi 0, %s17
      %s20 = sphi 0, %s18
      %s21 = sphi 0, %s19
      %s31 = sphi 0, %s33
      %s34 = sphi 0, %s31
      %s35 = sphi 0, %s34
      %s51 = sphi 0, %s35
      %s55 = sphi 0, %s55
      %s57 = sphi 0, %s55
      %s58 = sphi 0, %s57
      %s72 = sphi 0, %s58
      %s80 = sphi 0, %s82
      %s83 = sphi 0, %s80
      %s84 = sphi 0, %s83
      %s100 = sphi 0, %s84
      %s106 = sphi 0, %s108
      %s109 = sphi 0, %s106
      %s110 = sphi 0, %s109
      %s126 = sphi 0, %s110
    $region4: #{_gcn_forward_two_pass.2} parent=1 // loop_header_branch
      %12 = sbr.rel (%p10) target = $region8
    $region5: #{_gcn_forward_two_pass.2} parent=1 // loop_body
      %s14 = ssub.s32 %s9, 1
      %s15 = ssub.s32 %s9, 2
      %s22 = sadd.s32 1, %s17
      %p23 = scmp.ge.s32.totalorder %s22, 2
      %s24 = scalar_select %p23, 0, %s22
      %s25 = sadd.s32 1, %s16
      %s26 = scalar_select %p23, %s25, %s16
      %p27 = scmp.ge.s32.totalorder %s26, 2
      %s28 = scalar_select %p27, 0, %s26
      %s29 = ssub.s32 %s16, %s28
      %p30 = scmp.eq.s32.totalorder %s29, 0
      %s32 = sadd.s32 %s31, 1
      %s33 = scalar_select %p30, %s31, %s32
      %p36 = pneg %p30
      %p37 = scmp.eq.s32.totalorder %s9, 3
      %p38 = por %p36, %p37
      %p39 = scmp.ne.s32.totalorder %s31, %s34
      %p40 = scmp.eq.s32.totalorder %s9, 0
      %p41 = por %p39, %p40
      %p42 = scmp.ne.s32.totalorder %s31, %s34
      %p43 = scmp.eq.s32.totalorder %s14, 3
      %p44 = por %p42, %p43
      %p45 = scmp.ne.s32.totalorder %s34, %s35
      %p46 = scmp.eq.s32.totalorder %s14, 0
      %p47 = por %p45, %p46
      %p48 = scmp.ne.s32.totalorder %s34, %s35
      %p49 = scmp.eq.s32.totalorder %s15, 3
      %p50 = por %p48, %p49
      %p52 = scmp.ne.s32.totalorder %s35, %s51
      %p53 = scmp.eq.s32.totalorder %s15, 0
      %p54 = por %p52, %p53
      %s56 = sadd.s32 %s55, 1
      %p59 = scmp.eq.s32.totalorder %s9, 3
      %p60 = scmp.ne.s32.totalorder %s55, %s57
      %p61 = scmp.eq.s32.totalorder %s9, 0
      %p62 = por %p60, %p61
      %p63 = scmp.ne.s32.totalorder %s55, %s57
      %p64 = scmp.eq.s32.totalorder %s14, 3
      %p65 = por %p63, %p64
      %p66 = scmp.ne.s32.totalorder %s57, %s58
      %p67 = scmp.eq.s32.totalorder %s14, 0
      %p68 = por %p66, %p67
      %p69 = scmp.ne.s32.totalorder %s57, %s58
      %p70 = scmp.eq.s32.totalorder %s15, 3
      %p71 = por %p69, %p70
      %p73 = scmp.ne.s32.totalorder %s58, %s72
      %p74 = scmp.eq.s32.totalorder %s15, 0
      %p75 = por %p73, %p74
      %s76 = ssub.s32 %s16, %s28
      %s77 = ssub.s32 %s17, %s24
      %s78 = sor.u32 %s76, %s77
      %p79 = scmp.eq.s32.totalorder %s78, 0
      %s81 = sadd.s32 %s80, 1
      %s82 = scalar_select %p79, %s80, %s81
      %p85 = pneg %p79
      %p86 = scmp.eq.s32.totalorder %s9, 3
      %p87 = por %p85, %p86
      %p88 = scmp.ne.s32.totalorder %s80, %s83
      %p89 = scmp.eq.s32.totalorder %s9, 0
      %p90 = por %p88, %p89
      %p91 = scmp.ne.s32.totalorder %s80, %s83
      %p92 = scmp.eq.s32.totalorder %s14, 3
      %p93 = por %p91, %p92
      %p94 = scmp.ne.s32.totalorder %s83, %s84
      %p95 = scmp.eq.s32.totalorder %s14, 0
      %p96 = por %p94, %p95
      %p97 = scmp.ne.s32.totalorder %s83, %s84
      %p98 = scmp.eq.s32.totalorder %s15, 3
      %p99 = por %p97, %p98
      %p101 = scmp.ne.s32.totalorder %s84, %s100
      %p102 = scmp.eq.s32.totalorder %s15, 0
      %p103 = por %p101, %p102
      %s104 = ssub.s32 %s16, %s28
      %p105 = scmp.eq.s32.totalorder %s104, 0
      %s107 = sadd.s32 %s106, 1
      %s108 = scalar_select %p105, %s106, %s107
      %p111 = pneg %p105
      %p112 = scmp.eq.s32.totalorder %s9, 3
      %p113 = por %p111, %p112
      %p114 = scmp.ne.s32.totalorder %s106, %s109
      %p115 = scmp.eq.s32.totalorder %s9, 0
      %p116 = por %p114, %p115
      %p117 = scmp.ne.s32.totalorder %s106, %s109
      %p118 = scmp.eq.s32.totalorder %s14, 3
      %p119 = por %p117, %p118
      %p120 = scmp.ne.s32.totalorder %s109, %s110
      %p121 = scmp.eq.s32.totalorder %s14, 0
      %p122 = por %p120, %p121
      %p123 = scmp.ne.s32.totalorder %s109, %s110
      %p124 = scmp.eq.s32.totalorder %s15, 3
      %p125 = por %p123, %p124
      %p127 = scmp.ne.s32.totalorder %s110, %s126
      %p128 = scmp.eq.s32.totalorder %s15, 0
      %p129 = por %p127, %p128
      %p130 = scmp.le.s32.totalorder 1, %s9
      %p131 = scmp.lt.s32.totalorder %s9, 5
      %p132 = pnand %p130, %p131
      %p133 = pneg %p132
      // Predicated region
      $region9: #{_gcn_forward_two_pass.2} parent=5 // pred_check
        _
      $region10: #{_gcn_forward_two_pass.2} parent=5 // pred_check_branch
        %135 = sbr.rel (%p132) target = $region12
      $region11: #{_gcn_forward_two_pass.2} parent=5 // pred_region
        %s136 = ssub.s32 %s9, 1
        // Predicated region
        $region13: #{_gcn_forward_two_pass.2} parent=11 // pred_check
          %p137 = pneg %p68
        $region14: #{_gcn_forward_two_pass.2} parent=11 // pred_check_branch
          %139 = sbr.rel (%p137) target = $region16
        $region15: #{_gcn_forward_two_pass.2} parent=11 // pred_region
          _
        $region16: #{_gcn_forward_two_pass.2} parent=11 // pred_fallthru
          _
      $region12: #{_gcn_forward_two_pass.2} parent=5 // pred_fallthru
        _
      %p140 = scmp.lt.s32.totalorder %s9, 4
      // Predicated region
      $region17: #{_gcn_forward_two_pass.2} parent=5 // pred_check
        %p141 = pneg %p140
      $region18: #{_gcn_forward_two_pass.2} parent=5 // pred_check_branch
        %143 = sbr.rel (%p141) target = $region20
      $region19: #{_gcn_forward_two_pass.2} parent=5 // pred_region
        // Predicated region
        $region21: #{_gcn_forward_two_pass.2} parent=19 // pred_check
          %p144 = pneg %p41
        $region22: #{_gcn_forward_two_pass.2} parent=19 // pred_check_branch
          %146 = sbr.rel (%p144) target = $region24
        $region23: #{_gcn_forward_two_pass.2} parent=19 // pred_region
          %s147 = smul.u32 16, %s16
          %p148 = scmp.lt.s32.totalorder %s147, 31
          %s149 = scalar_select %p148, %s147, 31
          %s150 = smul.addr %s149, 4
          %s151 = scalar_lea.vmem %s0, %s150
          %s152 = smul.u32 16, %s16
        $region24: #{_gcn_forward_two_pass.2} parent=19 // pred_fallthru
          _
        // Predicated region
        $region25: #{_gcn_forward_two_pass.2} parent=19 // pred_check
          %p153 = pneg %p90
        $region26: #{_gcn_forward_two_pass.2} parent=19 // pred_check_branch
          %155 = sbr.rel (%p153) target = $region28
        $region27: #{_gcn_forward_two_pass.2} parent=19 // pred_region
          %s156 = sand.u32 %s80, 1
          %s157 = sand.u32 %s80, 1
          %s158 = smul.addr %s157, 64
          %s159 = scalar_lea.vmem [#allocation3], %s158
          %s160 = smul.u32 16, %s16
          %s161 = smul.addr %s160, 2
          %s162 = sadd.s32 %s17, %s161
          %s163 = smul.addr %s162, 4
          %s164 = scalar_lea.vmem %s2, %s163
          // Predicated region
          $region29: #{_gcn_forward_two_pass.2} parent=27 // pred_check
            _
          $region30: #{_gcn_forward_two_pass.2} parent=27 // pred_check_branch
            %166 = sbr.rel (0) target = $region32
          $region31: #{_gcn_forward_two_pass.2} parent=27 // pred_region
            // Predicated region
            $region33: #{_gcn_forward_two_pass.2} parent=31 // pred_check
              _
            $region34: #{_gcn_forward_two_pass.2} parent=31 // pred_check_branch
              %168 = sbr.rel target = $region36
            $region35: #{_gcn_forward_two_pass.2} parent=31 // pred_region
              // Predicated region
              $region48: #{_gcn_forward_two_pass.2} parent=35 // pred_check
                _
              $region49: #{_gcn_forward_two_pass.2} parent=35 // pred_check_branch
                %213 = sbr.rel (0) target = $region51
              $region50: #{_gcn_forward_two_pass.2} parent=35 // pred_region
                loop: start=0, step=1, limit=1
                $region52: #{_gcn_forward_two_pass.2} parent=50 // loop_pre_header
                  _
                $region53: #{_gcn_forward_two_pass.2} parent=50 // loop_header
                  %s215 = sphi 0, %s219
                  %p216 = scmp.ge.s32.totalorder %s215, 1
                  %s220 = sphi %s164, %s164
                  %s221 = sphi %s159, %s159
                $region54: #{_gcn_forward_two_pass.2} parent=50 // loop_header_branch
                  %218 = sbr.rel (%p216) target = $region58
                $region55: #{_gcn_forward_two_pass.2} parent=50 // loop_body
                  _
                $region56: #{_gcn_forward_two_pass.2} parent=50 // loop_footer
                  %s219 = sadd.s32 1, %s215
                $region57: #{_gcn_forward_two_pass.2} parent=50 // loop_footer_branch
                  %214 = sbr.rel target = $region53
                $region58: #{_gcn_forward_two_pass.2} parent=50 // loop_exit
                  _
                loop: start=0, step=1, limit=1
                $region59: #{_gcn_forward_two_pass.2} parent=50 // loop_pre_header
                  _
                $region60: #{_gcn_forward_two_pass.2} parent=50 // loop_header
                  %s224 = sphi 0, %s228
                  %p225 = scmp.ge.s32.totalorder %s224, 1
                  %s229 = sphi %s164, %s164
                  %s230 = sphi %s159, %s159
                $region61: #{_gcn_forward_two_pass.2} parent=50 // loop_header_branch
                  %227 = sbr.rel (%p225) target = $region65
                $region62: #{_gcn_forward_two_pass.2} parent=50 // loop_body
                  %v231 = vld [vmem:[%s229] sm:$0xf]
                  %232 = vst [vmem:[%s230] sm:$0xf] %v231
                  %v233 = vld [vmem:[%s229 + $0x8] sm:$0xf]
                  %234 = vst [vmem:[%s230 + $0x4] sm:$0xf] %v233
                  %v235 = vld [vmem:[%s229 + $0x10] sm:$0xf]
                  %236 = vst [vmem:[%s230 + $0x8] sm:$0xf] %v235
                  %v237 = vld [vmem:[%s229 + $0x18] sm:$0xf]
                  %238 = vst [vmem:[%s230 + $0xc] sm:$0xf] %v237
                  %v239 = vld [vmem:[%s229 + $0x20] sm:$0xf]
                  %240 = vst [vmem:[%s230 + $0x10] sm:$0xf] %v239
                  %v241 = vld [vmem:[%s229 + $0x28] sm:$0xf]
                  %242 = vst [vmem:[%s230 + $0x14] sm:$0xf] %v241
                  %v243 = vld [vmem:[%s229 + $0x30] sm:$0xf]
                  %244 = vst [vmem:[%s230 + $0x18] sm:$0xf] %v243
                  %v245 = vld [vmem:[%s229 + $0x38] sm:$0xf]
                  %246 = vst [vmem:[%s230 + $0x1c] sm:$0xf] %v245
                  %v247 = vld [vmem:[%s229 + $0x40] sm:$0xf]
                  %248 = vst [vmem:[%s230 + $0x20] sm:$0xf] %v247
                  %v249 = vld [vmem:[%s229 + $0x48] sm:$0xf]
                  %250 = vst [vmem:[%s230 + $0x24] sm:$0xf] %v249
                  %v251 = vld [vmem:[%s229 + $0x50] sm:$0xf]
                  %252 = vst [vmem:[%s230 + $0x28] sm:$0xf] %v251
                  %v253 = vld [vmem:[%s229 + $0x58] sm:$0xf]
                  %254 = vst [vmem:[%s230 + $0x2c] sm:$0xf] %v253
                  %v255 = vld [vmem:[%s229 + $0x60] sm:$0xf]
                  %256 = vst [vmem:[%s230 + $0x30] sm:$0xf] %v255
                  %v257 = vld [vmem:[%s229 + $0x68] sm:$0xf]
                  %258 = vst [vmem:[%s230 + $0x34] sm:$0xf] %v257
                  %v259 = vld [vmem:[%s229 + $0x70] sm:$0xf]
                  %260 = vst [vmem:[%s230 + $0x38] sm:$0xf] %v259
                  %v261 = vld [vmem:[%s229 + $0x78] sm:$0xf]
                  %262 = vst [vmem:[%s230 + $0x3c] sm:$0xf] %v261
                $region63: #{_gcn_forward_two_pass.2} parent=50 // loop_footer
                  %s228 = sadd.s32 1, %s224
                $region64: #{_gcn_forward_two_pass.2} parent=50 // loop_footer_branch
                  %223 = sbr.rel target = $region60
                $region65: #{_gcn_forward_two_pass.2} parent=50 // loop_exit
                  _
              $region51: #{_gcn_forward_two_pass.2} parent=35 // pred_fallthru
                _
            $region36: #{_gcn_forward_two_pass.2} parent=31 // pred_fallthru
              _
            // Predicated region
            $region37: #{_gcn_forward_two_pass.2} parent=31 // pred_check
              _
            $region38: #{_gcn_forward_two_pass.2} parent=31 // pred_check_branch
              %170 = sbr.rel (0) target = $region40
            $region39: #{_gcn_forward_two_pass.2} parent=31 // pred_region
              loop: start=0, step=1, limit=1
              $region41: #{_gcn_forward_two_pass.2} parent=39 // loop_pre_header
                _
              $region42: #{_gcn_forward_two_pass.2} parent=39 // loop_header
                %s173 = sphi 0, %s177
                %p174 = scmp.ge.s32.totalorder %s173, 1
                %s178 = sphi %s164, %s164
                %s179 = sphi %s159, %s159
              $region43: #{_gcn_forward_two_pass.2} parent=39 // loop_header_branch
                %176 = sbr.rel (%p174) target = $region47
              $region44: #{_gcn_forward_two_pass.2} parent=39 // loop_body
                %v180 = vld [vmem:[%s178] sm:$0xf]
                %181 = vst [vmem:[%s179] sm:$0xf] %v180
                %v182 = vld [vmem:[%s178 + $0x8] sm:$0xf]
                %183 = vst [vmem:[%s179 + $0x4] sm:$0xf] %v182
                %v184 = vld [vmem:[%s178 + $0x10] sm:$0xf]
                %185 = vst [vmem:[%s179 + $0x8] sm:$0xf] %v184
                %v186 = vld [vmem:[%s178 + $0x18] sm:$0xf]
                %187 = vst [vmem:[%s179 + $0xc] sm:$0xf] %v186
                %v188 = vld [vmem:[%s178 + $0x20] sm:$0xf]
                %189 = vst [vmem:[%s179 + $0x10] sm:$0xf] %v188
                %v190 = vld [vmem:[%s178 + $0x28] sm:$0xf]
                %191 = vst [vmem:[%s179 + $0x14] sm:$0xf] %v190
                %v192 = vld [vmem:[%s178 + $0x30] sm:$0xf]
                %193 = vst [vmem:[%s179 + $0x18] sm:$0xf] %v192
                %v194 = vld [vmem:[%s178 + $0x38] sm:$0xf]
                %195 = vst [vmem:[%s179 + $0x1c] sm:$0xf] %v194
                %v196 = vld [vmem:[%s178 + $0x40] sm:$0xf]
                %197 = vst [vmem:[%s179 + $0x20] sm:$0xf] %v196
                %v198 = vld [vmem:[%s178 + $0x48] sm:$0xf]
                %199 = vst [vmem:[%s179 + $0x24] sm:$0xf] %v198
                %v200 = vld [vmem:[%s178 + $0x50] sm:$0xf]
                %201 = vst [vmem:[%s179 + $0x28] sm:$0xf] %v200
                %v202 = vld [vmem:[%s178 + $0x58] sm:$0xf]
                %203 = vst [vmem:[%s179 + $0x2c] sm:$0xf] %v202
                %v204 = vld [vmem:[%s178 + $0x60] sm:$0xf]
                %205 = vst [vmem:[%s179 + $0x30] sm:$0xf] %v204
                %v206 = vld [vmem:[%s178 + $0x68] sm:$0xf]
                %207 = vst [vmem:[%s179 + $0x34] sm:$0xf] %v206
                %v208 = vld [vmem:[%s178 + $0x70] sm:$0xf]
                %209 = vst [vmem:[%s179 + $0x38] sm:$0xf] %v208
                %v210 = vld [vmem:[%s178 + $0x78] sm:$0xf]
                %211 = vst [vmem:[%s179 + $0x3c] sm:$0xf] %v210
              $region45: #{_gcn_forward_two_pass.2} parent=39 // loop_footer
                %s177 = sadd.s32 1, %s173
              $region46: #{_gcn_forward_two_pass.2} parent=39 // loop_footer_branch
                %172 = sbr.rel target = $region42
              $region47: #{_gcn_forward_two_pass.2} parent=39 // loop_exit
                _
            $region40: #{_gcn_forward_two_pass.2} parent=31 // pred_fallthru
              _
          $region32: #{_gcn_forward_two_pass.2} parent=27 // pred_fallthru
            _
          %263 = vnop
        $region28: #{_gcn_forward_two_pass.2} parent=19 // pred_fallthru
          _
      $region20: #{_gcn_forward_two_pass.2} parent=5 // pred_fallthru
        _
      %p264 = scmp.le.s32.totalorder 1, %s9
      %p265 = scmp.lt.s32.totalorder %s9, 5
      %p266 = pnand %p264, %p265
      %p267 = pneg %p266
      // Predicated region
      $region66: #{_gcn_forward_two_pass.2} parent=5 // pred_check
        _
      $region67: #{_gcn_forward_two_pass.2} parent=5 // pred_check_branch
        %269 = sbr.rel (%p266) target = $region69
      $region68: #{_gcn_forward_two_pass.2} parent=5 // pred_region
        %s270 = ssub.s32 %s9, 1
        %s271 = sand.u32 %s83, 1
        %s272 = sand.u32 %s83, 1
        %s273 = smul.addr %s272, 64
        %s274 = scalar_lea.vmem [#allocation3], %s273
        // Predicated region
        $region70: #{_gcn_forward_two_pass.2} parent=68 // pred_check
          %p275 = pneg %p96
        $region71: #{_gcn_forward_two_pass.2} parent=68 // pred_check_branch
          %277 = sbr.rel (%p275) target = $region73
        $region72: #{_gcn_forward_two_pass.2} parent=68 // pred_region
          _
        $region73: #{_gcn_forward_two_pass.2} parent=68 // pred_fallthru
          _
        %s278 = smul.u32 16, %s18
        %p279 = scmp.lt.s32.totalorder %s278, 31
        %s280 = scalar_select %p279, %s278, 31
        %s281 = smul.addr %s280, 4
        %s282 = scalar_lea.vmem %s0, %s281
        %p283 = pneg %p47
        %p284 = pneg %p44
        %p285 = pneg %p68
        %p286 = pneg %p65
        %s287 = sand.u32 %s83, 1
        %s288 = sand.u32 %s83, 1
        %s289 = smul.addr %s288, 64
        %s290 = scalar_lea.vmem [#allocation3], %s289
        %p291 = pneg %p96
        %p292 = pneg %p93
        %p293 = pneg %p122
        %p294 = pneg %p119
        %s295 = smul.u32 16, %s18
        %p296 = scmp.lt.s32.totalorder %s295, 31
        %s297 = scalar_select %p296, %s295, 31
        %s298 = smul.addr %s297, 4
        %s299 = scalar_lea.vmem %s3, %s298
        %s300 = smul.u32 16, %s18
        %p301 = scmp.lt.s32.totalorder %s300, 31
        %s302 = scalar_select %p301, %s300, 31
        %s303 = smul.addr %s302, 4
        %s304 = scalar_lea.vmem %s0, %s303
        %s305 = smul.u32 16, %s18
        %s306 = smul.u32 16, %s18
        %s307 = smul.u32 16, %s18
        %p308 = scmp.lt.s32.totalorder %s307, 31
        %s309 = scalar_select %p308, %s307, 31
        %s310 = smul.addr %s309, 4
        %s311 = scalar_lea.vmem %s3, %s310
        %s312 = smul.u32 16, %s18
        %p314 = scmp.eq.s32.totalorder %s19, 0
        // Predicated region
        $region74: #{_gcn_forward_two_pass.2} parent=68 // pred_check
          %p315 = pneg %p314
        $region75: #{_gcn_forward_two_pass.2} parent=68 // pred_check_branch
          %317 = sbr.rel (%p315) target = $region77
        $region76: #{_gcn_forward_two_pass.2} parent=68 // pred_region
          %vm318 = vcmask 7168
          %319 = vst.msk [vmem:[#allocation2] sm:$0xff] %vm318, 0.0
          %320 = vst.msk [vmem:[#allocation2 + $0x8] sm:$0xff] %vm318, 0.0
          %321 = vst.msk [vmem:[#allocation2 + $0x10] sm:$0xff] %vm318, 0.0
          %322 = vst.msk [vmem:[#allocation2 + $0x18] sm:$0xff] %vm318, 0.0
          %323 = vst.msk [vmem:[#allocation2 + $0x20] sm:$0xff] %vm318, 0.0
          %324 = vst.msk [vmem:[#allocation2 + $0x28] sm:$0xff] %vm318, 0.0
          %325 = vst.msk [vmem:[#allocation2 + $0x30] sm:$0xff] %vm318, 0.0
          %326 = vst.msk [vmem:[#allocation2 + $0x38] sm:$0xff] %vm318, 0.0
          %327 = vst.msk [vmem:[#allocation2 + $0x40] sm:$0xff] %vm318, 0.0
          %328 = vst.msk [vmem:[#allocation2 + $0x48] sm:$0xff] %vm318, 0.0
          %329 = vst.msk [vmem:[#allocation2 + $0x50] sm:$0xff] %vm318, 0.0
          %330 = vst.msk [vmem:[#allocation2 + $0x58] sm:$0xff] %vm318, 0.0
          %331 = vst.msk [vmem:[#allocation2 + $0x60] sm:$0xff] %vm318, 0.0
          %332 = vst.msk [vmem:[#allocation2 + $0x68] sm:$0xff] %vm318, 0.0
          %333 = vst.msk [vmem:[#allocation2 + $0x70] sm:$0xff] %vm318, 0.0
          %334 = vst.msk [vmem:[#allocation2 + $0x78] sm:$0xff] %vm318, 0.0
        $region77: #{_gcn_forward_two_pass.2} parent=68 // pred_fallthru
          _
        %v335 = vld [vmem:[#allocation2] sm:$0xff]
        %v336 = vld [vmem:[#allocation2 + $0x8] sm:$0xff]
        %v337 = vld [vmem:[#allocation2 + $0x10] sm:$0xff]
        %v338 = vld [vmem:[#allocation2 + $0x18] sm:$0xff]
        %v339 = vld [vmem:[#allocation2 + $0x20] sm:$0xff]
        %v340 = vld [vmem:[#allocation2 + $0x28] sm:$0xff]
        %v341 = vld [vmem:[#allocation2 + $0x30] sm:$0xff]
        %v342 = vld [vmem:[#allocation2 + $0x38] sm:$0xff]
        %v343 = vld [vmem:[#allocation2 + $0x40] sm:$0xff]
        %v344 = vld [vmem:[#allocation2 + $0x48] sm:$0xff]
        %v345 = vld [vmem:[#allocation2 + $0x50] sm:$0xff]
        %v346 = vld [vmem:[#allocation2 + $0x58] sm:$0xff]
        %v347 = vld [vmem:[#allocation2 + $0x60] sm:$0xff]
        %v348 = vld [vmem:[#allocation2 + $0x68] sm:$0xff]
        %v349 = vld [vmem:[#allocation2 + $0x70] sm:$0xff]
        %v350 = vld [vmem:[#allocation2 + $0x78] sm:$0xff]
        %v351 = vld [vmem:[%s274] sm:$0xf]
        %v352 = vld [vmem:[%s274 + $0x4] sm:$0xf]
        %v353 = vld [vmem:[%s274 + $0x8] sm:$0xf]
        %v354 = vld [vmem:[%s274 + $0xc] sm:$0xf]
        %v355 = vld [vmem:[%s274 + $0x10] sm:$0xf]
        %v356 = vld [vmem:[%s274 + $0x14] sm:$0xf]
        %v357 = vld [vmem:[%s274 + $0x18] sm:$0xf]
        %v358 = vld [vmem:[%s274 + $0x1c] sm:$0xf]
        %v359 = vld [vmem:[%s274 + $0x20] sm:$0xf]
        %v360 = vld [vmem:[%s274 + $0x24] sm:$0xf]
        %v361 = vld [vmem:[%s274 + $0x28] sm:$0xf]
        %v362 = vld [vmem:[%s274 + $0x2c] sm:$0xf]
        %v363 = vld [vmem:[%s274 + $0x30] sm:$0xf]
        %v364 = vld [vmem:[%s274 + $0x34] sm:$0xf]
        %v365 = vld [vmem:[%s274 + $0x38] sm:$0xf]
        %v366 = vld [vmem:[%s274 + $0x3c] sm:$0xf]
        %v367 = vunpack.c.l.bf16 %v351
        %v368 = vunpack.c.l.bf16 %v352
        %v369 = vunpack.c.l.bf16 %v353
        %v370 = vunpack.c.l.bf16 %v354
        %v371 = vunpack.c.l.bf16 %v355
        %v372 = vunpack.c.l.bf16 %v356
        %v373 = vunpack.c.l.bf16 %v357
        %v374 = vunpack.c.l.bf16 %v358
        %v375 = vunpack.c.l.bf16 %v359
        %v376 = vunpack.c.l.bf16 %v360
        %v377 = vunpack.c.l.bf16 %v361
        %v378 = vunpack.c.l.bf16 %v362
        %v379 = vunpack.c.l.bf16 %v363
        %v380 = vunpack.c.l.bf16 %v364
        %v381 = vunpack.c.l.bf16 %v365
        %v382 = vunpack.c.l.bf16 %v366
        %383 = vadd.xlane.f32.xlu0 %v367
        %v384 = vpop.xlane.xlu0 %383
        %385 = vadd.xlane.f32.xlu0 %v368
        %v386 = vpop.xlane.xlu0 %385
        %387 = vadd.xlane.f32.xlu0 %v369
        %v388 = vpop.xlane.xlu0 %387
        %389 = vadd.xlane.f32.xlu0 %v370
        %v390 = vpop.xlane.xlu0 %389
        %391 = vadd.xlane.f32.xlu0 %v371
        %v392 = vpop.xlane.xlu0 %391
        %393 = vadd.xlane.f32.xlu0 %v372
        %v394 = vpop.xlane.xlu0 %393
        %395 = vadd.xlane.f32.xlu0 %v373
        %v396 = vpop.xlane.xlu0 %395
        %397 = vadd.xlane.f32.xlu0 %v374
        %v398 = vpop.xlane.xlu0 %397
        %399 = vadd.xlane.f32.xlu0 %v375
        %v400 = vpop.xlane.xlu0 %399
        %401 = vadd.xlane.f32.xlu0 %v376
        %v402 = vpop.xlane.xlu0 %401
        %403 = vadd.xlane.f32.xlu0 %v377
        %v404 = vpop.xlane.xlu0 %403
        %405 = vadd.xlane.f32.xlu0 %v378
        %v406 = vpop.xlane.xlu0 %405
        %407 = vadd.xlane.f32.xlu0 %v379
        %v408 = vpop.xlane.xlu0 %407
        %409 = vadd.xlane.f32.xlu0 %v380
        %v410 = vpop.xlane.xlu0 %409
        %411 = vadd.xlane.f32.xlu0 %v381
        %v412 = vpop.xlane.xlu0 %411
        %413 = vadd.xlane.f32.xlu0 %v382
        %v414 = vpop.xlane.xlu0 %413
        %v415 = vadd.f32 %v335, %v384
        %v416 = vadd.f32 %v336, %v386
        %v417 = vadd.f32 %v337, %v388
        %v418 = vadd.f32 %v338, %v390
        %v419 = vadd.f32 %v339, %v392
        %v420 = vadd.f32 %v340, %v394
        %v421 = vadd.f32 %v341, %v396
        %v422 = vadd.f32 %v342, %v398
        %v423 = vadd.f32 %v343, %v400
        %v424 = vadd.f32 %v344, %v402
        %v425 = vadd.f32 %v345, %v404
        %v426 = vadd.f32 %v346, %v406
        %v427 = vadd.f32 %v347, %v408
        %v428 = vadd.f32 %v348, %v410
        %v429 = vadd.f32 %v349, %v412
        %v430 = vadd.f32 %v350, %v414
        %vm431 = vcmask 7168
        %432 = vst.msk [vmem:[#allocation2] sm:$0xff] %vm431, %v415
        %433 = vst.msk [vmem:[#allocation2 + $0x8] sm:$0xff] %vm431, %v416
        %434 = vst.msk [vmem:[#allocation2 + $0x10] sm:$0xff] %vm431, %v417
        %435 = vst.msk [vmem:[#allocation2 + $0x18] sm:$0xff] %vm431, %v418
        %436 = vst.msk [vmem:[#allocation2 + $0x20] sm:$0xff] %vm431, %v419
        %437 = vst.msk [vmem:[#allocation2 + $0x28] sm:$0xff] %vm431, %v420
        %438 = vst.msk [vmem:[#allocation2 + $0x30] sm:$0xff] %vm431, %v421
        %439 = vst.msk [vmem:[#allocation2 + $0x38] sm:$0xff] %vm431, %v422
        %440 = vst.msk [vmem:[#allocation2 + $0x40] sm:$0xff] %vm431, %v423
        %441 = vst.msk [vmem:[#allocation2 + $0x48] sm:$0xff] %vm431, %v424
        %442 = vst.msk [vmem:[#allocation2 + $0x50] sm:$0xff] %vm431, %v425
        %443 = vst.msk [vmem:[#allocation2 + $0x58] sm:$0xff] %vm431, %v426
        %444 = vst.msk [vmem:[#allocation2 + $0x60] sm:$0xff] %vm431, %v427
        %445 = vst.msk [vmem:[#allocation2 + $0x68] sm:$0xff] %vm431, %v428
        %446 = vst.msk [vmem:[#allocation2 + $0x70] sm:$0xff] %vm431, %v429
        %447 = vst.msk [vmem:[#allocation2 + $0x78] sm:$0xff] %vm431, %v430
        %p448 = scmp.eq.s32.totalorder %s19, 1
        // Predicated region
        $region78: #{_gcn_forward_two_pass.2} parent=68 // pred_check
          %p449 = pneg %p448
        $region79: #{_gcn_forward_two_pass.2} parent=68 // pred_check_branch
          %451 = sbr.rel (%p449) target = $region81
        $region80: #{_gcn_forward_two_pass.2} parent=68 // pred_region
          %v452 = vld [vmem:[%s304] sm:$0xf]
          %v453 = vld [vmem:[%s304 + $0x4] sm:$0xf]
          %v454 = vld [vmem:[%s304 + $0x8] sm:$0xf]
          %v455 = vld [vmem:[%s304 + $0xc] sm:$0xf]
          %v456 = vld [vmem:[%s304 + $0x10] sm:$0xf]
          %v457 = vld [vmem:[%s304 + $0x14] sm:$0xf]
          %v458 = vld [vmem:[%s304 + $0x18] sm:$0xf]
          %v459 = vld [vmem:[%s304 + $0x1c] sm:$0xf]
          %v460 = vld [vmem:[%s304 + $0x20] sm:$0xf]
          %v461 = vld [vmem:[%s304 + $0x24] sm:$0xf]
          %v462 = vld [vmem:[%s304 + $0x28] sm:$0xf]
          %v463 = vld [vmem:[%s304 + $0x2c] sm:$0xf]
          %v464 = vld [vmem:[%s304 + $0x30] sm:$0xf]
          %v465 = vld [vmem:[%s304 + $0x34] sm:$0xf]
          %v466 = vld [vmem:[%s304 + $0x38] sm:$0xf]
          %v467 = vld [vmem:[%s304 + $0x3c] sm:$0xf]
          %v468 = vld [vmem:[%s1] sm:$0xf]
          %v469 = vld [vmem:[%s1 + $0x4] sm:$0xf]
          %v470 = vld [vmem:[%s1 + $0x8] sm:$0xf]
          %v471 = vld [vmem:[%s1 + $0xc] sm:$0xf]
          %v472 = vld [vmem:[%s1 + $0x10] sm:$0xf]
          %v473 = vld [vmem:[%s1 + $0x14] sm:$0xf]
          %v474 = vld [vmem:[%s1 + $0x18] sm:$0xf]
          %v475 = vld [vmem:[%s1 + $0x1c] sm:$0xf]
          %v492 = vunpack.c.l.b16 %v452
          %v493 = vunpack.c.l.b16 %v453
          %v494 = vunpack.c.l.b16 %v454
          %v495 = vunpack.c.l.b16 %v455
          %v496 = vunpack.c.l.b16 %v456
          %v497 = vunpack.c.l.b16 %v457
          %v498 = vunpack.c.l.b16 %v458
          %v499 = vunpack.c.l.b16 %v459
          %v500 = vunpack.c.l.b16 %v460
          %v501 = vunpack.c.l.b16 %v461
          %v502 = vunpack.c.l.b16 %v462
          %v503 = vunpack.c.l.b16 %v463
          %v504 = vunpack.c.l.b16 %v464
          %v505 = vunpack.c.l.b16 %v465
          %v506 = vunpack.c.l.b16 %v466
          %v507 = vunpack.c.l.b16 %v467
          %v508 = vpack.c.b16 %v493, %v492
          %v509 = vpack.c.b16 %v495, %v494
          %v510 = vpack.c.b16 %v497, %v496
          %v511 = vpack.c.b16 %v499, %v498
          %v512 = vpack.c.b16 %v501, %v500
          %v513 = vpack.c.b16 %v503, %v502
          %v514 = vpack.c.b16 %v505, %v504
          %v515 = vpack.c.b16 %v507, %v506
          %v524 = vunpack.c.l.b16 %v468
          %v525 = vunpack.c.l.b16 %v469
          %v526 = vunpack.c.l.b16 %v470
          %v527 = vunpack.c.l.b16 %v471
          %v528 = vunpack.c.l.b16 %v472
          %v529 = vunpack.c.l.b16 %v473
          %v530 = vunpack.c.l.b16 %v474
          %v531 = vunpack.c.l.b16 %v475
          %v532 = vpack.c.b16 %v525, %v524
          %v533 = vpack.c.b16 %v527, %v526
          %v534 = vpack.c.b16 %v529, %v528
          %v535 = vpack.c.b16 %v531, %v530
          %vm540 = vcmask 523264
          %v542 = vsel %vm540, %v508, 0
          %v545 = vsel %vm540, %v509, 0
          %v548 = vsel %vm540, %v510, 0
          %v551 = vsel %vm540, %v511, 0
          %v554 = vsel %vm540, %v512, 0
          %v557 = vsel %vm540, %v513, 0
          %v560 = vsel %vm540, %v514, 0
          %v563 = vsel %vm540, %v515, 0
          %565 = vmatprep.subr.bf16.mxu0 0
          %566 = vmatpush1.bf16.msra.mxu0 %v532
          %567 = vmatprep.subr.bf16.mxu0 0
          %568 = vmatpush1.bf16.msra.mxu0 %v533
          %569 = vmatprep.subr.bf16.mxu0 0
          %570 = vmatpush1.bf16.msra.mxu0 %v534
          %571 = vmatprep.subr.bf16.mxu0 0
          %572 = vmatpush1.bf16.msra.mxu0 %v535
          %573 = vmatprep.subr.bf16.mxu0 0
          %574 = vmatpush1.bf16.msra.mxu0 0
          %575 = vmatprep.subr.bf16.mxu0 0
          %576 = vmatpush1.bf16.msra.mxu0 0
          %577 = vmatprep.subr.bf16.mxu0 0
          %578 = vmatpush1.bf16.msra.mxu0 0
          %579 = vmatprep.subr.bf16.mxu0 0
          %580 = vmatpush1.bf16.msra.mxu0 0
          %581 = vmatprep.subr.bf16.mxu0 0
          %582 = vmatpush1.bf16.msra.mxu0 0
          %583 = vmatprep.subr.bf16.mxu0 0
          %584 = vmatpush1.bf16.msra.mxu0 0
          %585 = vmatprep.subr.bf16.mxu0 0
          %586 = vmatpush1.bf16.msra.mxu0 0
          %587 = vmatprep.subr.bf16.mxu0 0
          %588 = vmatpush1.bf16.msra.mxu0 0
          %589 = vmatprep.subr.bf16.mxu0 0
          %590 = vmatpush1.bf16.msra.mxu0 0
          %591 = vmatprep.subr.bf16.mxu0 0
          %592 = vmatpush1.bf16.msra.mxu0 0
          %593 = vmatprep.subr.bf16.mxu0 0
          %594 = vmatpush1.bf16.msra.mxu0 0
          %595 = vmatprep.subr.bf16.mxu0 0
          %596 = vmatpush1.bf16.msra.mxu0 0
          %597 = vmatprep.mubr.bf16.mxu0 0
          %598 = vmatmul.mubr.bf16.gmra.mrb[0].mxu0 %v542
          %v599 = vpop.f32.mrb[0].mxu0
          %v600 = vadd.f32 0.0, %v599
          %v601 = vpop.f32.mrb[0].mxu0
          %v602 = vpop.f32.mrb[0].mxu0
          %v603 = vadd.f32 0.0, %v602
          %v604 = vpop.f32.mrb[0].mxu0
          %605 = vmatprep.mubr.bf16.mxu0 0
          %606 = vmatmul.mubr.bf16.gmra.mrb[0].mxu0 %v545
          %v607 = vpop.f32.mrb[0].mxu0
          %v608 = vadd.f32 0.0, %v607
          %v609 = vpop.f32.mrb[0].mxu0
          %v610 = vpop.f32.mrb[0].mxu0
          %v611 = vadd.f32 0.0, %v610
          %v612 = vpop.f32.mrb[0].mxu0
          %613 = vmatprep.mubr.bf16.mxu0 0
          %614 = vmatmul.mubr.bf16.gmra.mrb[0].mxu0 %v548
          %v615 = vpop.f32.mrb[0].mxu0
          %v616 = vadd.f32 0.0, %v615
          %v617 = vpop.f32.mrb[0].mxu0
          %v618 = vpop.f32.mrb[0].mxu0
          %v619 = vadd.f32 0.0, %v618
          %v620 = vpop.f32.mrb[0].mxu0
          %621 = vmatprep.mubr.bf16.mxu0 0
          %622 = vmatmul.mubr.bf16.gmra.mrb[0].mxu0 %v551
          %v623 = vpop.f32.mrb[0].mxu0
          %v624 = vadd.f32 0.0, %v623
          %v625 = vpop.f32.mrb[0].mxu0
          %v626 = vpop.f32.mrb[0].mxu0
          %v627 = vadd.f32 0.0, %v626
          %v628 = vpop.f32.mrb[0].mxu0
          %629 = vmatprep.mubr.bf16.mxu0 0
          %630 = vmatmul.mubr.bf16.gmra.mrb[0].mxu0 %v554
          %v631 = vpop.f32.mrb[0].mxu0
          %v632 = vadd.f32 0.0, %v631
          %v633 = vpop.f32.mrb[0].mxu0
          %v634 = vpop.f32.mrb[0].mxu0
          %v635 = vadd.f32 0.0, %v634
          %v636 = vpop.f32.mrb[0].mxu0
          %637 = vmatprep.mubr.bf16.mxu0 0
          %638 = vmatmul.mubr.bf16.gmra.mrb[0].mxu0 %v557
          %v639 = vpop.f32.mrb[0].mxu0
          %v640 = vadd.f32 0.0, %v639
          %v641 = vpop.f32.mrb[0].mxu0
          %v642 = vpop.f32.mrb[0].mxu0
          %v643 = vadd.f32 0.0, %v642
          %v644 = vpop.f32.mrb[0].mxu0
          %645 = vmatprep.mubr.bf16.mxu0 0
          %646 = vmatmul.mubr.bf16.gmra.mrb[0].mxu0 %v560
          %v647 = vpop.f32.mrb[0].mxu0
          %v648 = vadd.f32 0.0, %v647
          %v649 = vpop.f32.mrb[0].mxu0
          %v650 = vpop.f32.mrb[0].mxu0
          %v651 = vadd.f32 0.0, %v650
          %v652 = vpop.f32.mrb[0].mxu0
          %653 = vmatprep.mubr.bf16.mxu0 0
          %654 = vmatmul.mubr.bf16.gmra.mrb[0].mxu0 %v563
          %v655 = vpop.f32.mrb[0].mxu0
          %v656 = vadd.f32 0.0, %v655
          %v657 = vpop.f32.mrb[0].mxu0
          %v658 = vpop.f32.mrb[0].mxu0
          %v659 = vadd.f32 0.0, %v658
          %v660 = vpop.f32.mrb[0].mxu0
          %661 = vdwg.mxu0
          %v662 = vld [vmem:[#allocation2] sm:$0xff]
          %v663 = vld [vmem:[#allocation2 + $0x8] sm:$0xff]
          %v664 = vld [vmem:[#allocation2 + $0x10] sm:$0xff]
          %v665 = vld [vmem:[#allocation2 + $0x18] sm:$0xff]
          %v666 = vld [vmem:[#allocation2 + $0x20] sm:$0xff]
          %v667 = vld [vmem:[#allocation2 + $0x28] sm:$0xff]
          %v668 = vld [vmem:[#allocation2 + $0x30] sm:$0xff]
          %v669 = vld [vmem:[#allocation2 + $0x38] sm:$0xff]
          %v670 = vld [vmem:[#allocation2 + $0x40] sm:$0xff]
          %v671 = vld [vmem:[#allocation2 + $0x48] sm:$0xff]
          %v672 = vld [vmem:[#allocation2 + $0x50] sm:$0xff]
          %v673 = vld [vmem:[#allocation2 + $0x58] sm:$0xff]
          %v674 = vld [vmem:[#allocation2 + $0x60] sm:$0xff]
          %v675 = vld [vmem:[#allocation2 + $0x68] sm:$0xff]
          %v676 = vld [vmem:[#allocation2 + $0x70] sm:$0xff]
          %v677 = vld [vmem:[#allocation2 + $0x78] sm:$0xff]
          %v678 = vadd.f32 %v662, 3.0
          %v679 = vadd.f32 %v663, 3.0
          %v680 = vadd.f32 %v664, 3.0
          %v681 = vadd.f32 %v665, 3.0
          %v682 = vadd.f32 %v666, 3.0
          %v683 = vadd.f32 %v667, 3.0
          %v684 = vadd.f32 %v668, 3.0
          %v685 = vadd.f32 %v669, 3.0
          %v686 = vadd.f32 %v670, 3.0
          %v687 = vadd.f32 %v671, 3.0
          %v688 = vadd.f32 %v672, 3.0
          %v689 = vadd.f32 %v673, 3.0
          %v690 = vadd.f32 %v674, 3.0
          %v691 = vadd.f32 %v675, 3.0
          %v692 = vadd.f32 %v676, 3.0
          %v693 = vadd.f32 %v677, 3.0
          %vm694 = vcmp.gt.f32.partialorder %v678, 0.0
          %vm695 = vcmp.gt.f32.partialorder %v679, 0.0
          %vm696 = vcmp.gt.f32.partialorder %v680, 0.0
          %vm697 = vcmp.gt.f32.partialorder %v681, 0.0
          %vm698 = vcmp.gt.f32.partialorder %v682, 0.0
          %vm699 = vcmp.gt.f32.partialorder %v683, 0.0
          %vm700 = vcmp.gt.f32.partialorder %v684, 0.0
          %vm701 = vcmp.gt.f32.partialorder %v685, 0.0
          %vm702 = vcmp.gt.f32.partialorder %v686, 0.0
          %vm703 = vcmp.gt.f32.partialorder %v687, 0.0
          %vm704 = vcmp.gt.f32.partialorder %v688, 0.0
          %vm705 = vcmp.gt.f32.partialorder %v689, 0.0
          %vm706 = vcmp.gt.f32.partialorder %v690, 0.0
          %vm707 = vcmp.gt.f32.partialorder %v691, 0.0
          %vm708 = vcmp.gt.f32.partialorder %v692, 0.0
          %vm709 = vcmp.gt.f32.partialorder %v693, 0.0
          %v710 = vrsqrt.pop %v678
          %v711 = vrsqrt.pop %v679
          %v712 = vrsqrt.pop %v680
          %v713 = vrsqrt.pop %v681
          %v714 = vrsqrt.pop %v682
          %v715 = vrsqrt.pop %v683
          %v716 = vrsqrt.pop %v684
          %v717 = vrsqrt.pop %v685
          %v718 = vrsqrt.pop %v686
          %v719 = vrsqrt.pop %v687
          %v720 = vrsqrt.pop %v688
          %v721 = vrsqrt.pop %v689
          %v722 = vrsqrt.pop %v690
          %v723 = vrsqrt.pop %v691
          %v724 = vrsqrt.pop %v692
          %v725 = vrsqrt.pop %v693
          %v726 = vsel %vm694, %v710, 0.0
          %v727 = vsel %vm695, %v711, 0.0
          %v728 = vsel %vm696, %v712, 0.0
          %v729 = vsel %vm697, %v713, 0.0
          %v730 = vsel %vm698, %v714, 0.0
          %v731 = vsel %vm699, %v715, 0.0
          %v732 = vsel %vm700, %v716, 0.0
          %v733 = vsel %vm701, %v717, 0.0
          %v734 = vsel %vm702, %v718, 0.0
          %v735 = vsel %vm703, %v719, 0.0
          %v736 = vsel %vm704, %v720, 0.0
          %v737 = vsel %vm705, %v721, 0.0
          %v738 = vsel %vm706, %v722, 0.0
          %v739 = vsel %vm707, %v723, 0.0
          %v740 = vsel %vm708, %v724, 0.0
          %v741 = vsel %vm709, %v725, 0.0
          %743 = vset.pattern.permute.xlu0 0
          %744 = vperm.xlu0 %743, %v726
          %v745 = vpop.permute.xlu0 %744
          %748 = vset.pattern.permute.xlu0 0
          %749 = vperm.xlu0 %748, %v727
          %v750 = vpop.permute.xlu0 %749
          %753 = vset.pattern.permute.xlu0 0
          %754 = vperm.xlu0 %753, %v728
          %v755 = vpop.permute.xlu0 %754
          %758 = vset.pattern.permute.xlu0 0
          %759 = vperm.xlu0 %758, %v729
          %v760 = vpop.permute.xlu0 %759
          %763 = vset.pattern.permute.xlu0 0
          %764 = vperm.xlu0 %763, %v730
          %v765 = vpop.permute.xlu0 %764
          %768 = vset.pattern.permute.xlu0 0
          %769 = vperm.xlu0 %768, %v731
          %v770 = vpop.permute.xlu0 %769
          %773 = vset.pattern.permute.xlu0 0
          %774 = vperm.xlu0 %773, %v732
          %v775 = vpop.permute.xlu0 %774
          %778 = vset.pattern.permute.xlu0 0
          %779 = vperm.xlu0 %778, %v733
          %v780 = vpop.permute.xlu0 %779
          %783 = vset.pattern.permute.xlu0 0
          %784 = vperm.xlu0 %783, %v734
          %v785 = vpop.permute.xlu0 %784
          %788 = vset.pattern.permute.xlu0 0
          %789 = vperm.xlu0 %788, %v735
          %v790 = vpop.permute.xlu0 %789
          %793 = vset.pattern.permute.xlu0 0
          %794 = vperm.xlu0 %793, %v736
          %v795 = vpop.permute.xlu0 %794
          %798 = vset.pattern.permute.xlu0 0
          %799 = vperm.xlu0 %798, %v737
          %v800 = vpop.permute.xlu0 %799
          %803 = vset.pattern.permute.xlu0 0
          %804 = vperm.xlu0 %803, %v738
          %v805 = vpop.permute.xlu0 %804
          %808 = vset.pattern.permute.xlu0 0
          %809 = vperm.xlu0 %808, %v739
          %v810 = vpop.permute.xlu0 %809
          %813 = vset.pattern.permute.xlu0 0
          %814 = vperm.xlu0 %813, %v740
          %v815 = vpop.permute.xlu0 %814
          %818 = vset.pattern.permute.xlu0 0
          %819 = vperm.xlu0 %818, %v741
          %v820 = vpop.permute.xlu0 %819
          %v822 = vmul.f32 %v745, %v600
          %v823 = vmul.f32 %v750, %v603
          %v824 = vmul.f32 %v755, %v608
          %v825 = vmul.f32 %v760, %v611
          %v826 = vmul.f32 %v765, %v616
          %v827 = vmul.f32 %v770, %v619
          %v828 = vmul.f32 %v775, %v624
          %v829 = vmul.f32 %v780, %v627
          %v830 = vmul.f32 %v785, %v632
          %v831 = vmul.f32 %v790, %v635
          %v832 = vmul.f32 %v795, %v640
          %v833 = vmul.f32 %v800, %v643
          %v834 = vmul.f32 %v805, %v648
          %v835 = vmul.f32 %v810, %v651
          %v836 = vmul.f32 %v815, %v656
          %v837 = vmul.f32 %v820, %v659
          %v838 = vpack.c.bf16 %v823, %v822
          %v839 = vpack.c.bf16 %v825, %v824
          %v840 = vpack.c.bf16 %v827, %v826
          %v841 = vpack.c.bf16 %v829, %v828
          %v842 = vpack.c.bf16 %v831, %v830
          %v843 = vpack.c.bf16 %v833, %v832
          %v844 = vpack.c.bf16 %v835, %v834
          %v845 = vpack.c.bf16 %v837, %v836
          %v854 = vunpack.c.l.b16 %v838
          %v855 = vunpack.c.h.b16 %v838
          %v856 = vunpack.c.l.b16 %v839
          %v857 = vunpack.c.h.b16 %v839
          %v858 = vunpack.c.l.b16 %v840
          %v859 = vunpack.c.h.b16 %v840
          %v860 = vunpack.c.l.b16 %v841
          %v861 = vunpack.c.h.b16 %v841
          %v862 = vunpack.c.l.b16 %v842
          %v863 = vunpack.c.h.b16 %v842
          %v864 = vunpack.c.l.b16 %v843
          %v865 = vunpack.c.h.b16 %v843
          %v866 = vunpack.c.l.b16 %v844
          %v867 = vunpack.c.h.b16 %v844
          %v868 = vunpack.c.l.b16 %v845
          %v869 = vunpack.c.h.b16 %v845
          %v870 = vpack.c.b16 %v854, %v854
          %v871 = vpack.c.b16 %v855, %v855
          %v872 = vpack.c.b16 %v856, %v856
          %v873 = vpack.c.b16 %v857, %v857
          %v874 = vpack.c.b16 %v858, %v858
          %v875 = vpack.c.b16 %v859, %v859
          %v876 = vpack.c.b16 %v860, %v860
          %v877 = vpack.c.b16 %v861, %v861
          %v878 = vpack.c.b16 %v862, %v862
          %v879 = vpack.c.b16 %v863, %v863
          %v880 = vpack.c.b16 %v864, %v864
          %v881 = vpack.c.b16 %v865, %v865
          %v882 = vpack.c.b16 %v866, %v866
          %v883 = vpack.c.b16 %v867, %v867
          %v884 = vpack.c.b16 %v868, %v868
          %v885 = vpack.c.b16 %v869, %v869
          %902 = vst [vmem:[%s311] sm:$0xf] %v870
          %903 = vst [vmem:[%s311 + $0x4] sm:$0xf] %v871
          %904 = vst [vmem:[%s311 + $0x8] sm:$0xf] %v872
          %905 = vst [vmem:[%s311 + $0xc] sm:$0xf] %v873
          %906 = vst [vmem:[%s311 + $0x10] sm:$0xf] %v874
          %907 = vst [vmem:[%s311 + $0x14] sm:$0xf] %v875
          %908 = vst [vmem:[%s311 + $0x18] sm:$0xf] %v876
          %909 = vst [vmem:[%s311 + $0x1c] sm:$0xf] %v877
          %910 = vst [vmem:[%s311 + $0x20] sm:$0xf] %v878
          %911 = vst [vmem:[%s311 + $0x24] sm:$0xf] %v879
          %912 = vst [vmem:[%s311 + $0x28] sm:$0xf] %v880
          %913 = vst [vmem:[%s311 + $0x2c] sm:$0xf] %v881
          %914 = vst [vmem:[%s311 + $0x30] sm:$0xf] %v882
          %915 = vst [vmem:[%s311 + $0x34] sm:$0xf] %v883
          %916 = vst [vmem:[%s311 + $0x38] sm:$0xf] %v884
          %917 = vst [vmem:[%s311 + $0x3c] sm:$0xf] %v885
        $region81: #{_gcn_forward_two_pass.2} parent=68 // pred_fallthru
          _
        %s918 = smul.u32 16, %s18
        %p919 = scmp.lt.s32.totalorder %s918, 31
        %s920 = scalar_select %p919, %s918, 31
        %s921 = smul.addr %s920, 4
        %s922 = scalar_lea.vmem %s3, %s921
        // Predicated region
        $region82: #{_gcn_forward_two_pass.2} parent=68 // pred_check
          %p923 = pneg %p119
        $region83: #{_gcn_forward_two_pass.2} parent=68 // pred_check_branch
          %925 = sbr.rel (%p923) target = $region85
        $region84: #{_gcn_forward_two_pass.2} parent=68 // pred_region
          %s926 = smul.u32 16, %s18
        $region85: #{_gcn_forward_two_pass.2} parent=68 // pred_fallthru
          _
      $region69: #{_gcn_forward_two_pass.2} parent=5 // pred_fallthru
        _
      %p927 = scmp.le.s32.totalorder 2, %s9
      // Predicated region
      $region86: #{_gcn_forward_two_pass.2} parent=5 // pred_check
        %p928 = pneg %p927
      $region87: #{_gcn_forward_two_pass.2} parent=5 // pred_check_branch
        %930 = sbr.rel (%p928) target = $region89
      $region88: #{_gcn_forward_two_pass.2} parent=5 // pred_region
        %s931 = ssub.s32 %s9, 2
        // Predicated region
        $region90: #{_gcn_forward_two_pass.2} parent=88 // pred_check
          %p932 = pneg %p125
        $region91: #{_gcn_forward_two_pass.2} parent=88 // pred_check_branch
          %934 = sbr.rel (%p932) target = $region93
        $region92: #{_gcn_forward_two_pass.2} parent=88 // pred_region
          %s935 = smul.u32 16, %s20
          %p936 = scmp.lt.s32.totalorder %s935, 31
          %s937 = scalar_select %p936, %s935, 31
          %s938 = smul.addr %s937, 4
          %s939 = scalar_lea.vmem %s3, %s938
        $region93: #{_gcn_forward_two_pass.2} parent=88 // pred_fallthru
          _
      $region89: #{_gcn_forward_two_pass.2} parent=5 // pred_fallthru
        _
    $region6: #{_gcn_forward_two_pass.2} parent=1 // loop_footer
      %s13 = sadd.s32 1, %s9
    $region7: #{_gcn_forward_two_pass.2} parent=1 // loop_footer_branch
      %8 = sbr.rel target = $region3
    $region8: #{_gcn_forward_two_pass.2} parent=1 // loop_exit
      _

// kernel: _gcn_forward_two_pass.3
$region0: #{_gcn_forward_two_pass.3}
  #allocation0 [shape = 'u32[]', space=smem, size = 0x4, offset = 0x4, fixed_abs, tag = 'smem constant byte address 0x4 - core index']
  #allocation1 [shape = 'u32[144,128]{1,0:T(1,128)}', space=vmem, size = 0x12000, scoped, tag = 'internal scratch']
  #allocation2 [shape = 'f32[128,128]{1,0:T(8,128)}', space=vmem, size = 0x10000, scoped, tag = 'scratch operand']
  #allocation3 [shape = 'f32[128,1]{1,0:T(8,128)}', space=vmem, size = 0x10000, scoped, tag = 'scratch operand']
  %s0 = inlined_call_operand.vmem [shape: bf16[256,256], index: 0, kind: input, shape index: {}]
  %s1 = inlined_call_operand.vmem [shape: bf16[256,128], index: 1, kind: input, shape index: {}, may-alias: {1,2}]
  %s2 = inlined_call_operand.vmem [shape: bf16[256,128], index: 2, kind: input, shape index: {}, may-alias: {1,2}]
  %s3 = inlined_call_operand.vmem [shape: f32[256,128], index: 3, kind: output, shape index: {}]
  %s4 = sld [smem:[#allocation0]]
  $region94: #{_gcn_forward_two_pass.3} parent=0
    _
  %s6 = ssub.s32 1, %s4
  %s7 = scalar_select 0, %s6, %s4
  $region1: #{_gcn_forward_two_pass.3} parent=0
    #allocation4 [shape = 'u8[65536]{0}', space=vmem, size = 0x10000, scoped, tag = 'input window, operand 0']
    loop: start=0, step=1, limit=6
    $region2: #{_gcn_forward_two_pass.3} parent=1 // loop_pre_header
      _
    $region3: #{_gcn_forward_two_pass.3} parent=1 // loop_header
      %s9 = sphi 0, %s13
      %p10 = scmp.ge.s32.totalorder %s9, 6
      %s16 = sphi 0, %s28
      %s17 = sphi 0, %s24
      %s18 = sphi 0, %s16
      %s19 = sphi 0, %s17
      %s20 = sphi 0, %s18
      %s21 = sphi 0, %s19
      %s33 = sphi 0, %s35
      %s36 = sphi 0, %s33
      %s37 = sphi 0, %s36
      %s53 = sphi 0, %s37
      %s59 = sphi 0, %s61
      %s62 = sphi 0, %s59
      %s63 = sphi 0, %s62
      %s79 = sphi 0, %s63
      %s85 = sphi 0, %s87
      %s88 = sphi 0, %s85
      %s89 = sphi 0, %s88
      %s105 = sphi 0, %s89
      %s111 = sphi 0, %s113
      %s114 = sphi 0, %s111
      %s115 = sphi 0, %s114
      %s131 = sphi 0, %s115
    $region4: #{_gcn_forward_two_pass.3} parent=1 // loop_header_branch
      %12 = sbr.rel (%p10) target = $region8
    $region5: #{_gcn_forward_two_pass.3} parent=1 // loop_body
      %s14 = ssub.s32 %s9, 1
      %s15 = ssub.s32 %s9, 2
      %s22 = sadd.s32 1, %s17
      %p23 = scmp.ge.s32.totalorder %s22, 2
      %s24 = scalar_select %p23, 0, %s22
      %s25 = sadd.s32 1, %s16
      %s26 = scalar_select %p23, %s25, %s16
      %p27 = scmp.ge.s32.totalorder %s26, 2
      %s28 = scalar_select %p27, 0, %s26
      %s29 = ssub.s32 %s16, %s28
      %s30 = ssub.s32 %s17, %s24
      %s31 = sor.u32 %s29, %s30
      %p32 = scmp.eq.s32.totalorder %s31, 0
      %s34 = sadd.s32 %s33, 1
      %s35 = scalar_select %p32, %s33, %s34
      %p38 = pneg %p32
      %p39 = scmp.eq.s32.totalorder %s9, 3
      %p40 = por %p38, %p39
      %p41 = scmp.ne.s32.totalorder %s33, %s36
      %p42 = scmp.eq.s32.totalorder %s9, 0
      %p43 = por %p41, %p42
      %p44 = scmp.ne.s32.totalorder %s33, %s36
      %p45 = scmp.eq.s32.totalorder %s14, 3
      %p46 = por %p44, %p45
      %p47 = scmp.ne.s32.totalorder %s36, %s37
      %p48 = scmp.eq.s32.totalorder %s14, 0
      %p49 = por %p47, %p48
      %p50 = scmp.ne.s32.totalorder %s36, %s37
      %p51 = scmp.eq.s32.totalorder %s15, 3
      %p52 = por %p50, %p51
      %p54 = scmp.ne.s32.totalorder %s37, %s53
      %p55 = scmp.eq.s32.totalorder %s15, 0
      %p56 = por %p54, %p55
      %s57 = ssub.s32 %s17, %s24
      %p58 = scmp.eq.s32.totalorder %s57, 0
      %s60 = sadd.s32 %s59, 1
      %s61 = scalar_select %p58, %s59, %s60
      %p64 = pneg %p58
      %p65 = scmp.eq.s32.totalorder %s9, 3
      %p66 = por %p64, %p65
      %p67 = scmp.ne.s32.totalorder %s59, %s62
      %p68 = scmp.eq.s32.totalorder %s9, 0
      %p69 = por %p67, %p68
      %p70 = scmp.ne.s32.totalorder %s59, %s62
      %p71 = scmp.eq.s32.totalorder %s14, 3
      %p72 = por %p70, %p71
      %p73 = scmp.ne.s32.totalorder %s62, %s63
      %p74 = scmp.eq.s32.totalorder %s14, 0
      %p75 = por %p73, %p74
      %p76 = scmp.ne.s32.totalorder %s62, %s63
      %p77 = scmp.eq.s32.totalorder %s15, 3
      %p78 = por %p76, %p77
      %p80 = scmp.ne.s32.totalorder %s63, %s79
      %p81 = scmp.eq.s32.totalorder %s15, 0
      %p82 = por %p80, %p81
      %s83 = ssub.s32 %s16, %s28
      %p84 = scmp.eq.s32.totalorder %s83, 0
      %s86 = sadd.s32 %s85, 1
      %s87 = scalar_select %p84, %s85, %s86
      %p90 = pneg %p84
      %p91 = scmp.eq.s32.totalorder %s9, 3
      %p92 = por %p90, %p91
      %p93 = scmp.ne.s32.totalorder %s85, %s88
      %p94 = scmp.eq.s32.totalorder %s9, 0
      %p95 = por %p93, %p94
      %p96 = scmp.ne.s32.totalorder %s85, %s88
      %p97 = scmp.eq.s32.totalorder %s14, 3
      %p98 = por %p96, %p97
      %p99 = scmp.ne.s32.totalorder %s88, %s89
      %p100 = scmp.eq.s32.totalorder %s14, 0
      %p101 = por %p99, %p100
      %p102 = scmp.ne.s32.totalorder %s88, %s89
      %p103 = scmp.eq.s32.totalorder %s15, 3
      %p104 = por %p102, %p103
      %p106 = scmp.ne.s32.totalorder %s89, %s105
      %p107 = scmp.eq.s32.totalorder %s15, 0
      %p108 = por %p106, %p107
      %s109 = ssub.s32 %s16, %s28
      %p110 = scmp.eq.s32.totalorder %s109, 0
      %s112 = sadd.s32 %s111, 1
      %s113 = scalar_select %p110, %s111, %s112
      %p116 = pneg %p110
      %p117 = scmp.eq.s32.totalorder %s9, 3
      %p118 = por %p116, %p117
      %p119 = scmp.ne.s32.totalorder %s111, %s114
      %p120 = scmp.eq.s32.totalorder %s9, 0
      %p121 = por %p119, %p120
      %p122 = scmp.ne.s32.totalorder %s111, %s114
      %p123 = scmp.eq.s32.totalorder %s14, 3
      %p124 = por %p122, %p123
      %p125 = scmp.ne.s32.totalorder %s114, %s115
      %p126 = scmp.eq.s32.totalorder %s14, 0
      %p127 = por %p125, %p126
      %p128 = scmp.ne.s32.totalorder %s114, %s115
      %p129 = scmp.eq.s32.totalorder %s15, 3
      %p130 = por %p128, %p129
      %p132 = scmp.ne.s32.totalorder %s115, %s131
      %p133 = scmp.eq.s32.totalorder %s15, 0
      %p134 = por %p132, %p133
      %p135 = scmp.le.s32.totalorder 1, %s9
      %p136 = scmp.lt.s32.totalorder %s9, 5
      %p137 = pnand %p135, %p136
      %p138 = pneg %p137
      // Predicated region
      $region9: #{_gcn_forward_two_pass.3} parent=5 // pred_check
        _
      $region10: #{_gcn_forward_two_pass.3} parent=5 // pred_check_branch
        %140 = sbr.rel (%p137) target = $region12
      $region11: #{_gcn_forward_two_pass.3} parent=5 // pred_region
        %s141 = ssub.s32 %s9, 1
      $region12: #{_gcn_forward_two_pass.3} parent=5 // pred_fallthru
        _
      %p142 = scmp.lt.s32.totalorder %s9, 4
      // Predicated region
      $region13: #{_gcn_forward_two_pass.3} parent=5 // pred_check
        %p143 = pneg %p142
      $region14: #{_gcn_forward_two_pass.3} parent=5 // pred_check_branch
        %145 = sbr.rel (%p143) target = $region16
      $region15: #{_gcn_forward_two_pass.3} parent=5 // pred_region
        // Predicated region
        $region17: #{_gcn_forward_two_pass.3} parent=15 // pred_check
          %p146 = pneg %p43
        $region18: #{_gcn_forward_two_pass.3} parent=15 // pred_check_branch
          %148 = sbr.rel (%p146) target = $region20
        $region19: #{_gcn_forward_two_pass.3} parent=15 // pred_region
          %s149 = sand.u32 %s33, 1
          %s150 = sand.u32 %s33, 1
          %s151 = smul.addr %s150, 64
          %s152 = scalar_lea.vmem [#allocation4], %s151
          %s153 = smul.u32 16, %s16
          %s154 = smul.addr %s153, 2
          %s155 = sadd.s32 %s17, %s154
          %s156 = smul.addr %s155, 4
          %s157 = scalar_lea.vmem %s0, %s156
          // Predicated region
          $region21: #{_gcn_forward_two_pass.3} parent=19 // pred_check
            _
          $region22: #{_gcn_forward_two_pass.3} parent=19 // pred_check_branch
            %159 = sbr.rel (0) target = $region24
          $region23: #{_gcn_forward_two_pass.3} parent=19 // pred_region
            // Predicated region
            $region25: #{_gcn_forward_two_pass.3} parent=23 // pred_check
              _
            $region26: #{_gcn_forward_two_pass.3} parent=23 // pred_check_branch
              %161 = sbr.rel target = $region28
            $region27: #{_gcn_forward_two_pass.3} parent=23 // pred_region
              // Predicated region
              $region40: #{_gcn_forward_two_pass.3} parent=27 // pred_check
                _
              $region41: #{_gcn_forward_two_pass.3} parent=27 // pred_check_branch
                %206 = sbr.rel (0) target = $region43
              $region42: #{_gcn_forward_two_pass.3} parent=27 // pred_region
                loop: start=0, step=1, limit=1
                $region44: #{_gcn_forward_two_pass.3} parent=42 // loop_pre_header
                  _
                $region45: #{_gcn_forward_two_pass.3} parent=42 // loop_header
                  %s208 = sphi 0, %s212
                  %p209 = scmp.ge.s32.totalorder %s208, 1
                  %s213 = sphi %s157, %s157
                  %s214 = sphi %s152, %s152
                $region46: #{_gcn_forward_two_pass.3} parent=42 // loop_header_branch
                  %211 = sbr.rel (%p209) target = $region50
                $region47: #{_gcn_forward_two_pass.3} parent=42 // loop_body
                  _
                $region48: #{_gcn_forward_two_pass.3} parent=42 // loop_footer
                  %s212 = sadd.s32 1, %s208
                $region49: #{_gcn_forward_two_pass.3} parent=42 // loop_footer_branch
                  %207 = sbr.rel target = $region45
                $region50: #{_gcn_forward_two_pass.3} parent=42 // loop_exit
                  _
                loop: start=0, step=1, limit=1
                $region51: #{_gcn_forward_two_pass.3} parent=42 // loop_pre_header
                  _
                $region52: #{_gcn_forward_two_pass.3} parent=42 // loop_header
                  %s217 = sphi 0, %s221
                  %p218 = scmp.ge.s32.totalorder %s217, 1
                  %s222 = sphi %s157, %s157
                  %s223 = sphi %s152, %s152
                $region53: #{_gcn_forward_two_pass.3} parent=42 // loop_header_branch
                  %220 = sbr.rel (%p218) target = $region57
                $region54: #{_gcn_forward_two_pass.3} parent=42 // loop_body
                  %v224 = vld [vmem:[%s222] sm:$0xf]
                  %225 = vst [vmem:[%s223] sm:$0xf] %v224
                  %v226 = vld [vmem:[%s222 + $0x8] sm:$0xf]
                  %227 = vst [vmem:[%s223 + $0x4] sm:$0xf] %v226
                  %v228 = vld [vmem:[%s222 + $0x10] sm:$0xf]
                  %229 = vst [vmem:[%s223 + $0x8] sm:$0xf] %v228
                  %v230 = vld [vmem:[%s222 + $0x18] sm:$0xf]
                  %231 = vst [vmem:[%s223 + $0xc] sm:$0xf] %v230
                  %v232 = vld [vmem:[%s222 + $0x20] sm:$0xf]
                  %233 = vst [vmem:[%s223 + $0x10] sm:$0xf] %v232
                  %v234 = vld [vmem:[%s222 + $0x28] sm:$0xf]
                  %235 = vst [vmem:[%s223 + $0x14] sm:$0xf] %v234
                  %v236 = vld [vmem:[%s222 + $0x30] sm:$0xf]
                  %237 = vst [vmem:[%s223 + $0x18] sm:$0xf] %v236
                  %v238 = vld [vmem:[%s222 + $0x38] sm:$0xf]
                  %239 = vst [vmem:[%s223 + $0x1c] sm:$0xf] %v238
                  %v240 = vld [vmem:[%s222 + $0x40] sm:$0xf]
                  %241 = vst [vmem:[%s223 + $0x20] sm:$0xf] %v240
                  %v242 = vld [vmem:[%s222 + $0x48] sm:$0xf]
                  %243 = vst [vmem:[%s223 + $0x24] sm:$0xf] %v242
                  %v244 = vld [vmem:[%s222 + $0x50] sm:$0xf]
                  %245 = vst [vmem:[%s223 + $0x28] sm:$0xf] %v244
                  %v246 = vld [vmem:[%s222 + $0x58] sm:$0xf]
                  %247 = vst [vmem:[%s223 + $0x2c] sm:$0xf] %v246
                  %v248 = vld [vmem:[%s222 + $0x60] sm:$0xf]
                  %249 = vst [vmem:[%s223 + $0x30] sm:$0xf] %v248
                  %v250 = vld [vmem:[%s222 + $0x68] sm:$0xf]
                  %251 = vst [vmem:[%s223 + $0x34] sm:$0xf] %v250
                  %v252 = vld [vmem:[%s222 + $0x70] sm:$0xf]
                  %253 = vst [vmem:[%s223 + $0x38] sm:$0xf] %v252
                  %v254 = vld [vmem:[%s222 + $0x78] sm:$0xf]
                  %255 = vst [vmem:[%s223 + $0x3c] sm:$0xf] %v254
                $region55: #{_gcn_forward_two_pass.3} parent=42 // loop_footer
                  %s221 = sadd.s32 1, %s217
                $region56: #{_gcn_forward_two_pass.3} parent=42 // loop_footer_branch
                  %216 = sbr.rel target = $region52
                $region57: #{_gcn_forward_two_pass.3} parent=42 // loop_exit
                  _
              $region43: #{_gcn_forward_two_pass.3} parent=27 // pred_fallthru
                _
            $region28: #{_gcn_forward_two_pass.3} parent=23 // pred_fallthru
              _
            // Predicated region
            $region29: #{_gcn_forward_two_pass.3} parent=23 // pred_check
              _
            $region30: #{_gcn_forward_two_pass.3} parent=23 // pred_check_branch
              %163 = sbr.rel (0) target = $region32
            $region31: #{_gcn_forward_two_pass.3} parent=23 // pred_region
              loop: start=0, step=1, limit=1
              $region33: #{_gcn_forward_two_pass.3} parent=31 // loop_pre_header
                _
              $region34: #{_gcn_forward_two_pass.3} parent=31 // loop_header
                %s166 = sphi 0, %s170
                %p167 = scmp.ge.s32.totalorder %s166, 1
                %s171 = sphi %s157, %s157
                %s172 = sphi %s152, %s152
              $region35: #{_gcn_forward_two_pass.3} parent=31 // loop_header_branch
                %169 = sbr.rel (%p167) target = $region39
              $region36: #{_gcn_forward_two_pass.3} parent=31 // loop_body
                %v173 = vld [vmem:[%s171] sm:$0xf]
                %174 = vst [vmem:[%s172] sm:$0xf] %v173
                %v175 = vld [vmem:[%s171 + $0x8] sm:$0xf]
                %176 = vst [vmem:[%s172 + $0x4] sm:$0xf] %v175
                %v177 = vld [vmem:[%s171 + $0x10] sm:$0xf]
                %178 = vst [vmem:[%s172 + $0x8] sm:$0xf] %v177
                %v179 = vld [vmem:[%s171 + $0x18] sm:$0xf]
                %180 = vst [vmem:[%s172 + $0xc] sm:$0xf] %v179
                %v181 = vld [vmem:[%s171 + $0x20] sm:$0xf]
                %182 = vst [vmem:[%s172 + $0x10] sm:$0xf] %v181
                %v183 = vld [vmem:[%s171 + $0x28] sm:$0xf]
                %184 = vst [vmem:[%s172 + $0x14] sm:$0xf] %v183
                %v185 = vld [vmem:[%s171 + $0x30] sm:$0xf]
                %186 = vst [vmem:[%s172 + $0x18] sm:$0xf] %v185
                %v187 = vld [vmem:[%s171 + $0x38] sm:$0xf]
                %188 = vst [vmem:[%s172 + $0x1c] sm:$0xf] %v187
                %v189 = vld [vmem:[%s171 + $0x40] sm:$0xf]
                %190 = vst [vmem:[%s172 + $0x20] sm:$0xf] %v189
                %v191 = vld [vmem:[%s171 + $0x48] sm:$0xf]
                %192 = vst [vmem:[%s172 + $0x24] sm:$0xf] %v191
                %v193 = vld [vmem:[%s171 + $0x50] sm:$0xf]
                %194 = vst [vmem:[%s172 + $0x28] sm:$0xf] %v193
                %v195 = vld [vmem:[%s171 + $0x58] sm:$0xf]
                %196 = vst [vmem:[%s172 + $0x2c] sm:$0xf] %v195
                %v197 = vld [vmem:[%s171 + $0x60] sm:$0xf]
                %198 = vst [vmem:[%s172 + $0x30] sm:$0xf] %v197
                %v199 = vld [vmem:[%s171 + $0x68] sm:$0xf]
                %200 = vst [vmem:[%s172 + $0x34] sm:$0xf] %v199
                %v201 = vld [vmem:[%s171 + $0x70] sm:$0xf]
                %202 = vst [vmem:[%s172 + $0x38] sm:$0xf] %v201
                %v203 = vld [vmem:[%s171 + $0x78] sm:$0xf]
                %204 = vst [vmem:[%s172 + $0x3c] sm:$0xf] %v203
              $region37: #{_gcn_forward_two_pass.3} parent=31 // loop_footer
                %s170 = sadd.s32 1, %s166
              $region38: #{_gcn_forward_two_pass.3} parent=31 // loop_footer_branch
                %165 = sbr.rel target = $region34
              $region39: #{_gcn_forward_two_pass.3} parent=31 // loop_exit
                _
            $region32: #{_gcn_forward_two_pass.3} parent=23 // pred_fallthru
              _
          $region24: #{_gcn_forward_two_pass.3} parent=19 // pred_fallthru
            _
          %256 = vnop
        $region20: #{_gcn_forward_two_pass.3} parent=15 // pred_fallthru
          _
        // Predicated region
        $region58: #{_gcn_forward_two_pass.3} parent=15 // pred_check
          %p257 = pneg %p69
        $region59: #{_gcn_forward_two_pass.3} parent=15 // pred_check_branch
          %259 = sbr.rel (%p257) target = $region61
        $region60: #{_gcn_forward_two_pass.3} parent=15 // pred_region
          %s260 = smul.u32 16, %s17
          %p261 = scmp.lt.s32.totalorder %s260, 31
          %s262 = scalar_select %p261, %s260, 31
          %s263 = smul.addr %s262, 4
          %s264 = scalar_lea.vmem %s1, %s263
          %s265 = smul.u32 16, %s17
        $region61: #{_gcn_forward_two_pass.3} parent=15 // pred_fallthru
          _
        // Predicated region
        $region62: #{_gcn_forward_two_pass.3} parent=15 // pred_check
          %p266 = pneg %p95
        $region63: #{_gcn_forward_two_pass.3} parent=15 // pred_check_branch
          %268 = sbr.rel (%p266) target = $region65
        $region64: #{_gcn_forward_two_pass.3} parent=15 // pred_region
          %s269 = smul.u32 16, %s16
          %p270 = scmp.lt.s32.totalorder %s269, 31
          %s271 = scalar_select %p270, %s269, 31
          %s272 = smul.addr %s271, 4
          %s273 = scalar_lea.vmem %s2, %s272
          %s274 = smul.u32 16, %s16
        $region65: #{_gcn_forward_two_pass.3} parent=15 // pred_fallthru
          _
      $region16: #{_gcn_forward_two_pass.3} parent=5 // pred_fallthru
        _
      %p275 = scmp.le.s32.totalorder 1, %s9
      %p276 = scmp.lt.s32.totalorder %s9, 5
      %p277 = pnand %p275, %p276
      %p278 = pneg %p277
      // Predicated region
      $region66: #{_gcn_forward_two_pass.3} parent=5 // pred_check
        _
      $region67: #{_gcn_forward_two_pass.3} parent=5 // pred_check_branch
        %280 = sbr.rel (%p277) target = $region69
      $region68: #{_gcn_forward_two_pass.3} parent=5 // pred_region
        %s281 = ssub.s32 %s9, 1
        %s282 = sand.u32 %s36, 1
        %s283 = sand.u32 %s36, 1
        %s284 = smul.addr %s283, 64
        %s285 = scalar_lea.vmem [#allocation4], %s284
        // Predicated region
        $region70: #{_gcn_forward_two_pass.3} parent=68 // pred_check
          %p286 = pneg %p49
        $region71: #{_gcn_forward_two_pass.3} parent=68 // pred_check_branch
          %288 = sbr.rel (%p286) target = $region73
        $region72: #{_gcn_forward_two_pass.3} parent=68 // pred_region
          _
        $region73: #{_gcn_forward_two_pass.3} parent=68 // pred_fallthru
          _
        %s289 = sand.u32 %s36, 1
        %s290 = sand.u32 %s36, 1
        %s291 = smul.addr %s290, 64
        %s292 = scalar_lea.vmem [#allocation4], %s291
        %p293 = pneg %p49
        %p294 = pneg %p46
        %s295 = smul.u32 16, %s19
        %p296 = scmp.lt.s32.totalorder %s295, 31
        %s297 = scalar_select %p296, %s295, 31
        %s298 = smul.addr %s297, 4
        %s299 = scalar_lea.vmem %s1, %s298
        %p300 = pneg %p75
        %p301 = pneg %p72
        %s302 = smul.u32 16, %s18
        %p303 = scmp.lt.s32.totalorder %s302, 31
        %s304 = scalar_select %p303, %s302, 31
        %s305 = smul.addr %s304, 4
        %s306 = scalar_lea.vmem %s2, %s305
        %p307 = pneg %p101
        %p308 = pneg %p98
        %p309 = pneg %p127
        %p310 = pneg %p124
        %s311 = smul.u32 16, %s18
        %p312 = scmp.lt.s32.totalorder %s311, 31
        %s313 = scalar_select %p312, %s311, 31
        %s314 = smul.addr %s313, 8
        %s315 = scalar_lea.vmem %s3, %s314
        %s316 = smul.u32 16, %s18
        %s317 = smul.u32 16, %s19
        %p318 = scmp.lt.s32.totalorder %s317, 31
        %s319 = scalar_select %p318, %s317, 31
        %s320 = smul.addr %s319, 4
        %s321 = scalar_lea.vmem %s1, %s320
        %s322 = smul.u32 16, %s19
        %s323 = smul.u32 16, %s18
        %p324 = scmp.lt.s32.totalorder %s323, 31
        %s325 = scalar_select %p324, %s323, 31
        %s326 = smul.addr %s325, 4
        %s327 = scalar_lea.vmem %s2, %s326
        %s328 = smul.u32 16, %s18
        %s329 = smul.u32 16, %s18
        %p330 = scmp.lt.s32.totalorder %s329, 31
        %s331 = scalar_select %p330, %s329, 31
        %s332 = smul.addr %s331, 8
        %s333 = scalar_lea.vmem %s3, %s332
        %s334 = smul.u32 16, %s18
        %p336 = scmp.eq.s32.totalorder %s19, 0
        // Predicated region
        $region74: #{_gcn_forward_two_pass.3} parent=68 // pred_check
          %p337 = pneg %p336
        $region75: #{_gcn_forward_two_pass.3} parent=68 // pred_check_branch
          %339 = sbr.rel (%p337) target = $region77
        $region76: #{_gcn_forward_two_pass.3} parent=68 // pred_region
          %340 = vst [vmem:[#allocation2] sm:$0xff] 0.0
          %341 = vst [vmem:[#allocation2 + $0x8] sm:$0xff] 0.0
          %342 = vst [vmem:[#allocation2 + $0x10] sm:$0xff] 0.0
          %343 = vst [vmem:[#allocation2 + $0x18] sm:$0xff] 0.0
          %344 = vst [vmem:[#allocation2 + $0x20] sm:$0xff] 0.0
          %345 = vst [vmem:[#allocation2 + $0x28] sm:$0xff] 0.0
          %346 = vst [vmem:[#allocation2 + $0x30] sm:$0xff] 0.0
          %347 = vst [vmem:[#allocation2 + $0x38] sm:$0xff] 0.0
          %348 = vst [vmem:[#allocation2 + $0x40] sm:$0xff] 0.0
          %349 = vst [vmem:[#allocation2 + $0x48] sm:$0xff] 0.0
          %350 = vst [vmem:[#allocation2 + $0x50] sm:$0xff] 0.0
          %351 = vst [vmem:[#allocation2 + $0x58] sm:$0xff] 0.0
          %352 = vst [vmem:[#allocation2 + $0x60] sm:$0xff] 0.0
          %353 = vst [vmem:[#allocation2 + $0x68] sm:$0xff] 0.0
          %354 = vst [vmem:[#allocation2 + $0x70] sm:$0xff] 0.0
          %355 = vst [vmem:[#allocation2 + $0x78] sm:$0xff] 0.0
          %vm356 = vcmask 7168
          %357 = vst.msk [vmem:[#allocation3] sm:$0xff] %vm356, 0.0
          %358 = vst.msk [vmem:[#allocation3 + $0x8] sm:$0xff] %vm356, 0.0
          %359 = vst.msk [vmem:[#allocation3 + $0x10] sm:$0xff] %vm356, 0.0
          %360 = vst.msk [vmem:[#allocation3 + $0x18] sm:$0xff] %vm356, 0.0
          %361 = vst.msk [vmem:[#allocation3 + $0x20] sm:$0xff] %vm356, 0.0
          %362 = vst.msk [vmem:[#allocation3 + $0x28] sm:$0xff] %vm356, 0.0
          %363 = vst.msk [vmem:[#allocation3 + $0x30] sm:$0xff] %vm356, 0.0
          %364 = vst.msk [vmem:[#allocation3 + $0x38] sm:$0xff] %vm356, 0.0
          %365 = vst.msk [vmem:[#allocation3 + $0x40] sm:$0xff] %vm356, 0.0
          %366 = vst.msk [vmem:[#allocation3 + $0x48] sm:$0xff] %vm356, 0.0
          %367 = vst.msk [vmem:[#allocation3 + $0x50] sm:$0xff] %vm356, 0.0
          %368 = vst.msk [vmem:[#allocation3 + $0x58] sm:$0xff] %vm356, 0.0
          %369 = vst.msk [vmem:[#allocation3 + $0x60] sm:$0xff] %vm356, 0.0
          %370 = vst.msk [vmem:[#allocation3 + $0x68] sm:$0xff] %vm356, 0.0
          %371 = vst.msk [vmem:[#allocation3 + $0x70] sm:$0xff] %vm356, 0.0
          %372 = vst.msk [vmem:[#allocation3 + $0x78] sm:$0xff] %vm356, 0.0
        $region77: #{_gcn_forward_two_pass.3} parent=68 // pred_fallthru
          _
        %v373 = vld [vmem:[%s285] sm:$0xf]
        %v374 = vld [vmem:[%s285 + $0x4] sm:$0xf]
        %v375 = vld [vmem:[%s285 + $0x8] sm:$0xf]
        %v376 = vld [vmem:[%s285 + $0xc] sm:$0xf]
        %v377 = vld [vmem:[%s285 + $0x10] sm:$0xf]
        %v378 = vld [vmem:[%s285 + $0x14] sm:$0xf]
        %v379 = vld [vmem:[%s285 + $0x18] sm:$0xf]
        %v380 = vld [vmem:[%s285 + $0x1c] sm:$0xf]
        %v381 = vld [vmem:[%s285 + $0x20] sm:$0xf]
        %v382 = vld [vmem:[%s285 + $0x24] sm:$0xf]
        %v383 = vld [vmem:[%s285 + $0x28] sm:$0xf]
        %v384 = vld [vmem:[%s285 + $0x2c] sm:$0xf]
        %v385 = vld [vmem:[%s285 + $0x30] sm:$0xf]
        %v386 = vld [vmem:[%s285 + $0x34] sm:$0xf]
        %v387 = vld [vmem:[%s285 + $0x38] sm:$0xf]
        %v388 = vld [vmem:[%s285 + $0x3c] sm:$0xf]
        %v389 = vld [vmem:[#allocation3] sm:$0xff]
        %v390 = vld [vmem:[#allocation3 + $0x8] sm:$0xff]
        %v391 = vld [vmem:[#allocation3 + $0x10] sm:$0xff]
        %v392 = vld [vmem:[#allocation3 + $0x18] sm:$0xff]
        %v393 = vld [vmem:[#allocation3 + $0x20] sm:$0xff]
        %v394 = vld [vmem:[#allocation3 + $0x28] sm:$0xff]
        %v395 = vld [vmem:[#allocation3 + $0x30] sm:$0xff]
        %v396 = vld [vmem:[#allocation3 + $0x38] sm:$0xff]
        %v397 = vld [vmem:[#allocation3 + $0x40] sm:$0xff]
        %v398 = vld [vmem:[#allocation3 + $0x48] sm:$0xff]
        %v399 = vld [vmem:[#allocation3 + $0x50] sm:$0xff]
        %v400 = vld [vmem:[#allocation3 + $0x58] sm:$0xff]
        %v401 = vld [vmem:[#allocation3 + $0x60] sm:$0xff]
        %v402 = vld [vmem:[#allocation3 + $0x68] sm:$0xff]
        %v403 = vld [vmem:[#allocation3 + $0x70] sm:$0xff]
        %v404 = vld [vmem:[#allocation3 + $0x78] sm:$0xff]
        %v405 = vunpack.c.l.bf16 %v373
        %v406 = vunpack.c.l.bf16 %v374
        %v407 = vunpack.c.l.bf16 %v375
        %v408 = vunpack.c.l.bf16 %v376
        %v409 = vunpack.c.l.bf16 %v377
        %v410 = vunpack.c.l.bf16 %v378
        %v411 = vunpack.c.l.bf16 %v379
        %v412 = vunpack.c.l.bf16 %v380
        %v413 = vunpack.c.l.bf16 %v381
        %v414 = vunpack.c.l.bf16 %v382
        %v415 = vunpack.c.l.bf16 %v383
        %v416 = vunpack.c.l.bf16 %v384
        %v417 = vunpack.c.l.bf16 %v385
        %v418 = vunpack.c.l.bf16 %v386
        %v419 = vunpack.c.l.bf16 %v387
        %v420 = vunpack.c.l.bf16 %v388
        %421 = vadd.xlane.f32.xlu0 %v405
        %v422 = vpop.xlane.xlu0 %421
        %423 = vadd.xlane.f32.xlu0 %v406
        %v424 = vpop.xlane.xlu0 %423
        %425 = vadd.xlane.f32.xlu0 %v407
        %v426 = vpop.xlane.xlu0 %425
        %427 = vadd.xlane.f32.xlu0 %v408
        %v428 = vpop.xlane.xlu0 %427
        %429 = vadd.xlane.f32.xlu0 %v409
        %v430 = vpop.xlane.xlu0 %429
        %431 = vadd.xlane.f32.xlu0 %v410
        %v432 = vpop.xlane.xlu0 %431
        %433 = vadd.xlane.f32.xlu0 %v411
        %v434 = vpop.xlane.xlu0 %433
        %435 = vadd.xlane.f32.xlu0 %v412
        %v436 = vpop.xlane.xlu0 %435
        %437 = vadd.xlane.f32.xlu0 %v413
        %v438 = vpop.xlane.xlu0 %437
        %439 = vadd.xlane.f32.xlu0 %v414
        %v440 = vpop.xlane.xlu0 %439
        %441 = vadd.xlane.f32.xlu0 %v415
        %v442 = vpop.xlane.xlu0 %441
        %443 = vadd.xlane.f32.xlu0 %v416
        %v444 = vpop.xlane.xlu0 %443
        %445 = vadd.xlane.f32.xlu0 %v417
        %v446 = vpop.xlane.xlu0 %445
        %447 = vadd.xlane.f32.xlu0 %v418
        %v448 = vpop.xlane.xlu0 %447
        %449 = vadd.xlane.f32.xlu0 %v419
        %v450 = vpop.xlane.xlu0 %449
        %451 = vadd.xlane.f32.xlu0 %v420
        %v452 = vpop.xlane.xlu0 %451
        %v453 = vadd.f32 %v389, %v422
        %v454 = vadd.f32 %v390, %v424
        %v455 = vadd.f32 %v391, %v426
        %v456 = vadd.f32 %v392, %v428
        %v457 = vadd.f32 %v393, %v430
        %v458 = vadd.f32 %v394, %v432
        %v459 = vadd.f32 %v395, %v434
        %v460 = vadd.f32 %v396, %v436
        %v461 = vadd.f32 %v397, %v438
        %v462 = vadd.f32 %v398, %v440
        %v463 = vadd.f32 %v399, %v442
        %v464 = vadd.f32 %v400, %v444
        %v465 = vadd.f32 %v401, %v446
        %v466 = vadd.f32 %v402, %v448
        %v467 = vadd.f32 %v403, %v450
        %v468 = vadd.f32 %v404, %v452
        %vm469 = vcmask 7168
        %470 = vst.msk [vmem:[#allocation3] sm:$0xff] %vm469, %v453
        %471 = vst.msk [vmem:[#allocation3 + $0x8] sm:$0xff] %vm469, %v454
        %472 = vst.msk [vmem:[#allocation3 + $0x10] sm:$0xff] %vm469, %v455
        %473 = vst.msk [vmem:[#allocation3 + $0x18] sm:$0xff] %vm469, %v456
        %474 = vst.msk [vmem:[#allocation3 + $0x20] sm:$0xff] %vm469, %v457
        %475 = vst.msk [vmem:[#allocation3 + $0x28] sm:$0xff] %vm469, %v458
        %476 = vst.msk [vmem:[#allocation3 + $0x30] sm:$0xff] %vm469, %v459
        %477 = vst.msk [vmem:[#allocation3 + $0x38] sm:$0xff] %vm469, %v460
        %478 = vst.msk [vmem:[#allocation3 + $0x40] sm:$0xff] %vm469, %v461
        %479 = vst.msk [vmem:[#allocation3 + $0x48] sm:$0xff] %vm469, %v462
        %480 = vst.msk [vmem:[#allocation3 + $0x50] sm:$0xff] %vm469, %v463
        %481 = vst.msk [vmem:[#allocation3 + $0x58] sm:$0xff] %vm469, %v464
        %482 = vst.msk [vmem:[#allocation3 + $0x60] sm:$0xff] %vm469, %v465
        %483 = vst.msk [vmem:[#allocation3 + $0x68] sm:$0xff] %vm469, %v466
        %484 = vst.msk [vmem:[#allocation3 + $0x70] sm:$0xff] %vm469, %v467
        %485 = vst.msk [vmem:[#allocation3 + $0x78] sm:$0xff] %vm469, %v468
        %v486 = vld [vmem:[#allocation2] sm:$0xff]
        %v487 = vld [vmem:[#allocation2 + $0x8] sm:$0xff]
        %v488 = vld [vmem:[#allocation2 + $0x10] sm:$0xff]
        %v489 = vld [vmem:[#allocation2 + $0x18] sm:$0xff]
        %v490 = vld [vmem:[#allocation2 + $0x20] sm:$0xff]
        %v491 = vld [vmem:[#allocation2 + $0x28] sm:$0xff]
        %v492 = vld [vmem:[#allocation2 + $0x30] sm:$0xff]
        %v493 = vld [vmem:[#allocation2 + $0x38] sm:$0xff]
        %v494 = vld [vmem:[#allocation2 + $0x40] sm:$0xff]
        %v495 = vld [vmem:[#allocation2 + $0x48] sm:$0xff]
        %v496 = vld [vmem:[#allocation2 + $0x50] sm:$0xff]
        %v497 = vld [vmem:[#allocation2 + $0x58] sm:$0xff]
        %v498 = vld [vmem:[#allocation2 + $0x60] sm:$0xff]
        %v499 = vld [vmem:[#allocation2 + $0x68] sm:$0xff]
        %v500 = vld [vmem:[#allocation2 + $0x70] sm:$0xff]
        %v501 = vld [vmem:[#allocation2 + $0x78] sm:$0xff]
        %v502 = vld [vmem:[%s321] sm:$0xf]
        %v503 = vld [vmem:[%s321 + $0x4] sm:$0xf]
        %v504 = vld [vmem:[%s321 + $0x8] sm:$0xf]
        %v505 = vld [vmem:[%s321 + $0xc] sm:$0xf]
        %v506 = vld [vmem:[%s321 + $0x10] sm:$0xf]
        %v507 = vld [vmem:[%s321 + $0x14] sm:$0xf]
        %v508 = vld [vmem:[%s321 + $0x18] sm:$0xf]
        %v509 = vld [vmem:[%s321 + $0x1c] sm:$0xf]
        %v510 = vld [vmem:[%s321 + $0x20] sm:$0xf]
        %v511 = vld [vmem:[%s321 + $0x24] sm:$0xf]
        %v512 = vld [vmem:[%s321 + $0x28] sm:$0xf]
        %v513 = vld [vmem:[%s321 + $0x2c] sm:$0xf]
        %v514 = vld [vmem:[%s321 + $0x30] sm:$0xf]
        %v515 = vld [vmem:[%s321 + $0x34] sm:$0xf]
        %v516 = vld [vmem:[%s321 + $0x38] sm:$0xf]
        %v517 = vld [vmem:[%s321 + $0x3c] sm:$0xf]
        %v534 = vunpack.c.l.b16 %v373
        %v535 = vunpack.c.l.b16 %v374
        %v536 = vunpack.c.l.b16 %v375
        %v537 = vunpack.c.l.b16 %v376
        %v538 = vunpack.c.l.b16 %v377
        %v539 = vunpack.c.l.b16 %v378
        %v540 = vunpack.c.l.b16 %v379
        %v541 = vunpack.c.l.b16 %v380
        %v542 = vunpack.c.l.b16 %v381
        %v543 = vunpack.c.l.b16 %v382
        %v544 = vunpack.c.l.b16 %v383
        %v545 = vunpack.c.l.b16 %v384
        %v546 = vunpack.c.l.b16 %v385
        %v547 = vunpack.c.l.b16 %v386
        %v548 = vunpack.c.l.b16 %v387
        %v549 = vunpack.c.l.b16 %v388
        %v550 = vpack.c.b16 %v535, %v534
        %v551 = vpack.c.b16 %v537, %v536
        %v552 = vpack.c.b16 %v539, %v538
        %v553 = vpack.c.b16 %v541, %v540
        %v554 = vpack.c.b16 %v543, %v542
        %v555 = vpack.c.b16 %v545, %v544
        %v556 = vpack.c.b16 %v547, %v546
        %v557 = vpack.c.b16 %v549, %v548
        %v582 = vunpack.c.l.b16 %v502
        %v583 = vunpack.c.l.b16 %v503
        %v584 = vunpack.c.l.b16 %v504
        %v585 = vunpack.c.l.b16 %v505
        %v586 = vunpack.c.l.b16 %v506
        %v587 = vunpack.c.l.b16 %v507
        %v588 = vunpack.c.l.b16 %v508
        %v589 = vunpack.c.l.b16 %v509
        %v590 = vunpack.c.l.b16 %v510
        %v591 = vunpack.c.l.b16 %v511
        %v592 = vunpack.c.l.b16 %v512
        %v593 = vunpack.c.l.b16 %v513
        %v594 = vunpack.c.l.b16 %v514
        %v595 = vunpack.c.l.b16 %v515
        %v596 = vunpack.c.l.b16 %v516
        %v597 = vunpack.c.l.b16 %v517
        %v598 = vpack.c.b16 %v583, %v582
        %v599 = vpack.c.b16 %v585, %v584
        %v600 = vpack.c.b16 %v587, %v586
        %v601 = vpack.c.b16 %v589, %v588
        %v602 = vpack.c.b16 %v591, %v590
        %v603 = vpack.c.b16 %v593, %v592
        %v604 = vpack.c.b16 %v595, %v594
        %v605 = vpack.c.b16 %v597, %v596
        %614 = vmatprep.subr.bf16.mxu0 0
        %615 = vmatpush1.bf16.msra.mxu0 %v598
        %616 = vmatprep.subr.bf16.mxu0 0
        %617 = vmatpush1.bf16.msra.mxu0 %v599
        %618 = vmatprep.subr.bf16.mxu0 0
        %619 = vmatpush1.bf16.msra.mxu0 %v600
        %620 = vmatprep.subr.bf16.mxu0 0
        %621 = vmatpush1.bf16.msra.mxu0 %v601
        %622 = vmatprep.subr.bf16.mxu0 0
        %623 = vmatpush1.bf16.msra.mxu0 %v602
        %624 = vmatprep.subr.bf16.mxu0 0
        %625 = vmatpush1.bf16.msra.mxu0 %v603
        %626 = vmatprep.subr.bf16.mxu0 0
        %627 = vmatpush1.bf16.msra.mxu0 %v604
        %628 = vmatprep.subr.bf16.mxu0 0
        %629 = vmatpush1.bf16.msra.mxu0 %v605
        %630 = vmatprep.subr.bf16.mxu0 0
        %631 = vmatpush1.bf16.msra.mxu0 0
        %632 = vmatprep.subr.bf16.mxu0 0
        %633 = vmatpush1.bf16.msra.mxu0 0
        %634 = vmatprep.subr.bf16.mxu0 0
        %635 = vmatpush1.bf16.msra.mxu0 0
        %636 = vmatprep.subr.bf16.mxu0 0
        %637 = vmatpush1.bf16.msra.mxu0 0
        %638 = vmatprep.subr.bf16.mxu0 0
        %639 = vmatpush1.bf16.msra.mxu0 0
        %640 = vmatprep.subr.bf16.mxu0 0
        %641 = vmatpush1.bf16.msra.mxu0 0
        %642 = vmatprep.subr.bf16.mxu0 0
        %643 = vmatpush1.bf16.msra.mxu0 0
        %644 = vmatprep.subr.bf16.mxu0 0
        %645 = vmatpush1.bf16.msra.mxu0 0
        %646 = vmatprep.mubr.bf16.mxu0 0
        %647 = vmatmul.mubr.bf16.gmra.mrb[0].mxu0 %v550
        %v648 = vpop.f32.mrb[0].mxu0
        %v649 = vadd.f32 0.0, %v648
        %v650 = vpop.f32.mrb[0].mxu0
        %v651 = vpop.f32.mrb[0].mxu0
        %v652 = vadd.f32 0.0, %v651
        %v653 = vpop.f32.mrb[0].mxu0
        %654 = vmatprep.mubr.bf16.mxu0 0
        %655 = vmatmul.mubr.bf16.gmra.mrb[0].mxu0 %v551
        %v656 = vpop.f32.mrb[0].mxu0
        %v657 = vadd.f32 0.0, %v656
        %v658 = vpop.f32.mrb[0].mxu0
        %v659 = vpop.f32.mrb[0].mxu0
        %v660 = vadd.f32 0.0, %v659
        %v661 = vpop.f32.mrb[0].mxu0
        %662 = vmatprep.mubr.bf16.mxu0 0
        %663 = vmatmul.mubr.bf16.gmra.mrb[0].mxu0 %v552
        %v664 = vpop.f32.mrb[0].mxu0
        %v665 = vadd.f32 0.0, %v664
        %v666 = vpop.f32.mrb[0].mxu0
        %v667 = vpop.f32.mrb[0].mxu0
        %v668 = vadd.f32 0.0, %v667
        %v669 = vpop.f32.mrb[0].mxu0
        %670 = vmatprep.mubr.bf16.mxu0 0
        %671 = vmatmul.mubr.bf16.gmra.mrb[0].mxu0 %v553
        %v672 = vpop.f32.mrb[0].mxu0
        %v673 = vadd.f32 0.0, %v672
        %v674 = vpop.f32.mrb[0].mxu0
        %v675 = vpop.f32.mrb[0].mxu0
        %v676 = vadd.f32 0.0, %v675
        %v677 = vpop.f32.mrb[0].mxu0
        %678 = vmatprep.mubr.bf16.mxu0 0
        %679 = vmatmul.mubr.bf16.gmra.mrb[0].mxu0 %v554
        %v680 = vpop.f32.mrb[0].mxu0
        %v681 = vadd.f32 0.0, %v680
        %v682 = vpop.f32.mrb[0].mxu0
        %v683 = vpop.f32.mrb[0].mxu0
        %v684 = vadd.f32 0.0, %v683
        %v685 = vpop.f32.mrb[0].mxu0
        %686 = vmatprep.mubr.bf16.mxu0 0
        %687 = vmatmul.mubr.bf16.gmra.mrb[0].mxu0 %v555
        %v688 = vpop.f32.mrb[0].mxu0
        %v689 = vadd.f32 0.0, %v688
        %v690 = vpop.f32.mrb[0].mxu0
        %v691 = vpop.f32.mrb[0].mxu0
        %v692 = vadd.f32 0.0, %v691
        %v693 = vpop.f32.mrb[0].mxu0
        %694 = vmatprep.mubr.bf16.mxu0 0
        %695 = vmatmul.mubr.bf16.gmra.mrb[0].mxu0 %v556
        %v696 = vpop.f32.mrb[0].mxu0
        %v697 = vadd.f32 0.0, %v696
        %v698 = vpop.f32.mrb[0].mxu0
        %v699 = vpop.f32.mrb[0].mxu0
        %v700 = vadd.f32 0.0, %v699
        %v701 = vpop.f32.mrb[0].mxu0
        %702 = vmatprep.mubr.bf16.mxu0 0
        %703 = vmatmul.mubr.bf16.gmra.mrb[0].mxu0 %v557
        %v704 = vpop.f32.mrb[0].mxu0
        %v705 = vadd.f32 0.0, %v704
        %v706 = vpop.f32.mrb[0].mxu0
        %v707 = vpop.f32.mrb[0].mxu0
        %v708 = vadd.f32 0.0, %v707
        %v709 = vpop.f32.mrb[0].mxu0
        %710 = vdwg.mxu0
        %v711 = vadd.f32 %v486, %v649
        %v712 = vadd.f32 %v487, %v652
        %v713 = vadd.f32 %v488, %v657
        %v714 = vadd.f32 %v489, %v660
        %v715 = vadd.f32 %v490, %v665
        %v716 = vadd.f32 %v491, %v668
        %v717 = vadd.f32 %v492, %v673
        %v718 = vadd.f32 %v493, %v676
        %v719 = vadd.f32 %v494, %v681
        %v720 = vadd.f32 %v495, %v684
        %v721 = vadd.f32 %v496, %v689
        %v722 = vadd.f32 %v497, %v692
        %v723 = vadd.f32 %v498, %v697
        %v724 = vadd.f32 %v499, %v700
        %v725 = vadd.f32 %v500, %v705
        %v726 = vadd.f32 %v501, %v708
        %727 = vst [vmem:[#allocation2] sm:$0xff] %v711
        %728 = vst [vmem:[#allocation2 + $0x8] sm:$0xff] %v712
        %729 = vst [vmem:[#allocation2 + $0x10] sm:$0xff] %v713
        %730 = vst [vmem:[#allocation2 + $0x18] sm:$0xff] %v714
        %731 = vst [vmem:[#allocation2 + $0x20] sm:$0xff] %v715
        %732 = vst [vmem:[#allocation2 + $0x28] sm:$0xff] %v716
        %733 = vst [vmem:[#allocation2 + $0x30] sm:$0xff] %v717
        %734 = vst [vmem:[#allocation2 + $0x38] sm:$0xff] %v718
        %735 = vst [vmem:[#allocation2 + $0x40] sm:$0xff] %v719
        %736 = vst [vmem:[#allocation2 + $0x48] sm:$0xff] %v720
        %737 = vst [vmem:[#allocation2 + $0x50] sm:$0xff] %v721
        %738 = vst [vmem:[#allocation2 + $0x58] sm:$0xff] %v722
        %739 = vst [vmem:[#allocation2 + $0x60] sm:$0xff] %v723
        %740 = vst [vmem:[#allocation2 + $0x68] sm:$0xff] %v724
        %741 = vst [vmem:[#allocation2 + $0x70] sm:$0xff] %v725
        %742 = vst [vmem:[#allocation2 + $0x78] sm:$0xff] %v726
        %p743 = scmp.eq.s32.totalorder %s19, 1
        // Predicated region
        $region78: #{_gcn_forward_two_pass.3} parent=68 // pred_check
          %p744 = pneg %p743
        $region79: #{_gcn_forward_two_pass.3} parent=68 // pred_check_branch
          %746 = sbr.rel (%p744) target = $region81
        $region80: #{_gcn_forward_two_pass.3} parent=68 // pred_region
          %v747 = vld [vmem:[#allocation3] sm:$0xff]
          %v748 = vld [vmem:[#allocation3 + $0x8] sm:$0xff]
          %v749 = vld [vmem:[#allocation3 + $0x10] sm:$0xff]
          %v750 = vld [vmem:[#allocation3 + $0x18] sm:$0xff]
          %v751 = vld [vmem:[#allocation3 + $0x20] sm:$0xff]
          %v752 = vld [vmem:[#allocation3 + $0x28] sm:$0xff]
          %v753 = vld [vmem:[#allocation3 + $0x30] sm:$0xff]
          %v754 = vld [vmem:[#allocation3 + $0x38] sm:$0xff]
          %v755 = vld [vmem:[#allocation3 + $0x40] sm:$0xff]
          %v756 = vld [vmem:[#allocation3 + $0x48] sm:$0xff]
          %v757 = vld [vmem:[#allocation3 + $0x50] sm:$0xff]
          %v758 = vld [vmem:[#allocation3 + $0x58] sm:$0xff]
          %v759 = vld [vmem:[#allocation3 + $0x60] sm:$0xff]
          %v760 = vld [vmem:[#allocation3 + $0x68] sm:$0xff]
          %v761 = vld [vmem:[#allocation3 + $0x70] sm:$0xff]
          %v762 = vld [vmem:[#allocation3 + $0x78] sm:$0xff]
          %v763 = vadd.f32 %v747, 3.0
          %v764 = vadd.f32 %v748, 3.0
          %v765 = vadd.f32 %v749, 3.0
          %v766 = vadd.f32 %v750, 3.0
          %v767 = vadd.f32 %v751, 3.0
          %v768 = vadd.f32 %v752, 3.0
          %v769 = vadd.f32 %v753, 3.0
          %v770 = vadd.f32 %v754, 3.0
          %v771 = vadd.f32 %v755, 3.0
          %v772 = vadd.f32 %v756, 3.0
          %v773 = vadd.f32 %v757, 3.0
          %v774 = vadd.f32 %v758, 3.0
          %v775 = vadd.f32 %v759, 3.0
          %v776 = vadd.f32 %v760, 3.0
          %v777 = vadd.f32 %v761, 3.0
          %v778 = vadd.f32 %v762, 3.0
          %vm779 = vcmp.gt.f32.partialorder %v763, 0.0
          %vm780 = vcmp.gt.f32.partialorder %v764, 0.0
          %vm781 = vcmp.gt.f32.partialorder %v765, 0.0
          %vm782 = vcmp.gt.f32.partialorder %v766, 0.0
          %vm783 = vcmp.gt.f32.partialorder %v767, 0.0
          %vm784 = vcmp.gt.f32.partialorder %v768, 0.0
          %vm785 = vcmp.gt.f32.partialorder %v769, 0.0
          %vm786 = vcmp.gt.f32.partialorder %v770, 0.0
          %vm787 = vcmp.gt.f32.partialorder %v771, 0.0
          %vm788 = vcmp.gt.f32.partialorder %v772, 0.0
          %vm789 = vcmp.gt.f32.partialorder %v773, 0.0
          %vm790 = vcmp.gt.f32.partialorder %v774, 0.0
          %vm791 = vcmp.gt.f32.partialorder %v775, 0.0
          %vm792 = vcmp.gt.f32.partialorder %v776, 0.0
          %vm793 = vcmp.gt.f32.partialorder %v777, 0.0
          %vm794 = vcmp.gt.f32.partialorder %v778, 0.0
          %v795 = vrsqrt.pop %v763
          %v796 = vrsqrt.pop %v764
          %v797 = vrsqrt.pop %v765
          %v798 = vrsqrt.pop %v766
          %v799 = vrsqrt.pop %v767
          %v800 = vrsqrt.pop %v768
          %v801 = vrsqrt.pop %v769
          %v802 = vrsqrt.pop %v770
          %v803 = vrsqrt.pop %v771
          %v804 = vrsqrt.pop %v772
          %v805 = vrsqrt.pop %v773
          %v806 = vrsqrt.pop %v774
          %v807 = vrsqrt.pop %v775
          %v808 = vrsqrt.pop %v776
          %v809 = vrsqrt.pop %v777
          %v810 = vrsqrt.pop %v778
          %v811 = vsel %vm779, %v795, 0.0
          %v812 = vsel %vm780, %v796, 0.0
          %v813 = vsel %vm781, %v797, 0.0
          %v814 = vsel %vm782, %v798, 0.0
          %v815 = vsel %vm783, %v799, 0.0
          %v816 = vsel %vm784, %v800, 0.0
          %v817 = vsel %vm785, %v801, 0.0
          %v818 = vsel %vm786, %v802, 0.0
          %v819 = vsel %vm787, %v803, 0.0
          %v820 = vsel %vm788, %v804, 0.0
          %v821 = vsel %vm789, %v805, 0.0
          %v822 = vsel %vm790, %v806, 0.0
          %v823 = vsel %vm791, %v807, 0.0
          %v824 = vsel %vm792, %v808, 0.0
          %v825 = vsel %vm793, %v809, 0.0
          %v826 = vsel %vm794, %v810, 0.0
          %v827 = vld [vmem:[#allocation2] sm:$0xff]
          %v828 = vld [vmem:[#allocation2 + $0x8] sm:$0xff]
          %v829 = vld [vmem:[#allocation2 + $0x10] sm:$0xff]
          %v830 = vld [vmem:[#allocation2 + $0x18] sm:$0xff]
          %v831 = vld [vmem:[#allocation2 + $0x20] sm:$0xff]
          %v832 = vld [vmem:[#allocation2 + $0x28] sm:$0xff]
          %v833 = vld [vmem:[#allocation2 + $0x30] sm:$0xff]
          %v834 = vld [vmem:[#allocation2 + $0x38] sm:$0xff]
          %v835 = vld [vmem:[#allocation2 + $0x40] sm:$0xff]
          %v836 = vld [vmem:[#allocation2 + $0x48] sm:$0xff]
          %v837 = vld [vmem:[#allocation2 + $0x50] sm:$0xff]
          %v838 = vld [vmem:[#allocation2 + $0x58] sm:$0xff]
          %v839 = vld [vmem:[#allocation2 + $0x60] sm:$0xff]
          %v840 = vld [vmem:[#allocation2 + $0x68] sm:$0xff]
          %v841 = vld [vmem:[#allocation2 + $0x70] sm:$0xff]
          %v842 = vld [vmem:[#allocation2 + $0x78] sm:$0xff]
          %v843 = vld [vmem:[%s327] sm:$0xf]
          %v844 = vld [vmem:[%s327 + $0x4] sm:$0xf]
          %v845 = vld [vmem:[%s327 + $0x8] sm:$0xf]
          %v846 = vld [vmem:[%s327 + $0xc] sm:$0xf]
          %v847 = vld [vmem:[%s327 + $0x10] sm:$0xf]
          %v848 = vld [vmem:[%s327 + $0x14] sm:$0xf]
          %v849 = vld [vmem:[%s327 + $0x18] sm:$0xf]
          %v850 = vld [vmem:[%s327 + $0x1c] sm:$0xf]
          %v851 = vld [vmem:[%s327 + $0x20] sm:$0xf]
          %v852 = vld [vmem:[%s327 + $0x24] sm:$0xf]
          %v853 = vld [vmem:[%s327 + $0x28] sm:$0xf]
          %v854 = vld [vmem:[%s327 + $0x2c] sm:$0xf]
          %v855 = vld [vmem:[%s327 + $0x30] sm:$0xf]
          %v856 = vld [vmem:[%s327 + $0x34] sm:$0xf]
          %v857 = vld [vmem:[%s327 + $0x38] sm:$0xf]
          %v858 = vld [vmem:[%s327 + $0x3c] sm:$0xf]
          %v859 = vunpack.c.l.bf16 %v843
          %v860 = vunpack.c.l.bf16 %v844
          %v861 = vunpack.c.l.bf16 %v845
          %v862 = vunpack.c.l.bf16 %v846
          %v863 = vunpack.c.l.bf16 %v847
          %v864 = vunpack.c.l.bf16 %v848
          %v865 = vunpack.c.l.bf16 %v849
          %v866 = vunpack.c.l.bf16 %v850
          %v867 = vunpack.c.l.bf16 %v851
          %v868 = vunpack.c.l.bf16 %v852
          %v869 = vunpack.c.l.bf16 %v853
          %v870 = vunpack.c.l.bf16 %v854
          %v871 = vunpack.c.l.bf16 %v855
          %v872 = vunpack.c.l.bf16 %v856
          %v873 = vunpack.c.l.bf16 %v857
          %v874 = vunpack.c.l.bf16 %v858
          %v875 = vmul.f32 %v859, 3.0
          %v876 = vmul.f32 %v860, 3.0
          %v877 = vmul.f32 %v861, 3.0
          %v878 = vmul.f32 %v862, 3.0
          %v879 = vmul.f32 %v863, 3.0
          %v880 = vmul.f32 %v864, 3.0
          %v881 = vmul.f32 %v865, 3.0
          %v882 = vmul.f32 %v866, 3.0
          %v883 = vmul.f32 %v867, 3.0
          %v884 = vmul.f32 %v868, 3.0
          %v885 = vmul.f32 %v869, 3.0
          %v886 = vmul.f32 %v870, 3.0
          %v887 = vmul.f32 %v871, 3.0
          %v888 = vmul.f32 %v872, 3.0
          %v889 = vmul.f32 %v873, 3.0
          %v890 = vmul.f32 %v874, 3.0
          %v891 = vadd.f32 %v827, %v875
          %v892 = vadd.f32 %v828, %v876
          %v893 = vadd.f32 %v829, %v877
          %v894 = vadd.f32 %v830, %v878
          %v895 = vadd.f32 %v831, %v879
          %v896 = vadd.f32 %v832, %v880
          %v897 = vadd.f32 %v833, %v881
          %v898 = vadd.f32 %v834, %v882
          %v899 = vadd.f32 %v835, %v883
          %v900 = vadd.f32 %v836, %v884
          %v901 = vadd.f32 %v837, %v885
          %v902 = vadd.f32 %v838, %v886
          %v903 = vadd.f32 %v839, %v887
          %v904 = vadd.f32 %v840, %v888
          %v905 = vadd.f32 %v841, %v889
          %v906 = vadd.f32 %v842, %v890
          %908 = vset.pattern.permute.xlu0 0
          %909 = vperm.xlu0 %908, %v811
          %v910 = vpop.permute.xlu0 %909
          %913 = vset.pattern.permute.xlu0 0
          %914 = vperm.xlu0 %913, %v812
          %v915 = vpop.permute.xlu0 %914
          %918 = vset.pattern.permute.xlu0 0
          %919 = vperm.xlu0 %918, %v813
          %v920 = vpop.permute.xlu0 %919
          %923 = vset.pattern.permute.xlu0 0
          %924 = vperm.xlu0 %923, %v814
          %v925 = vpop.permute.xlu0 %924
          %928 = vset.pattern.permute.xlu0 0
          %929 = vperm.xlu0 %928, %v815
          %v930 = vpop.permute.xlu0 %929
          %933 = vset.pattern.permute.xlu0 0
          %934 = vperm.xlu0 %933, %v816
          %v935 = vpop.permute.xlu0 %934
          %938 = vset.pattern.permute.xlu0 0
          %939 = vperm.xlu0 %938, %v817
          %v940 = vpop.permute.xlu0 %939
          %943 = vset.pattern.permute.xlu0 0
          %944 = vperm.xlu0 %943, %v818
          %v945 = vpop.permute.xlu0 %944
          %948 = vset.pattern.permute.xlu0 0
          %949 = vperm.xlu0 %948, %v819
          %v950 = vpop.permute.xlu0 %949
          %953 = vset.pattern.permute.xlu0 0
          %954 = vperm.xlu0 %953, %v820
          %v955 = vpop.permute.xlu0 %954
          %958 = vset.pattern.permute.xlu0 0
          %959 = vperm.xlu0 %958, %v821
          %v960 = vpop.permute.xlu0 %959
          %963 = vset.pattern.permute.xlu0 0
          %964 = vperm.xlu0 %963, %v822
          %v965 = vpop.permute.xlu0 %964
          %968 = vset.pattern.permute.xlu0 0
          %969 = vperm.xlu0 %968, %v823
          %v970 = vpop.permute.xlu0 %969
          %973 = vset.pattern.permute.xlu0 0
          %974 = vperm.xlu0 %973, %v824
          %v975 = vpop.permute.xlu0 %974
          %978 = vset.pattern.permute.xlu0 0
          %979 = vperm.xlu0 %978, %v825
          %v980 = vpop.permute.xlu0 %979
          %983 = vset.pattern.permute.xlu0 0
          %984 = vperm.xlu0 %983, %v826
          %v985 = vpop.permute.xlu0 %984
          %v987 = vmul.f32 %v910, %v891
          %v988 = vmul.f32 %v915, %v892
          %v989 = vmul.f32 %v920, %v893
          %v990 = vmul.f32 %v925, %v894
          %v991 = vmul.f32 %v930, %v895
          %v992 = vmul.f32 %v935, %v896
          %v993 = vmul.f32 %v940, %v897
          %v994 = vmul.f32 %v945, %v898
          %v995 = vmul.f32 %v950, %v899
          %v996 = vmul.f32 %v955, %v900
          %v997 = vmul.f32 %v960, %v901
          %v998 = vmul.f32 %v965, %v902
          %v999 = vmul.f32 %v970, %v903
          %v1000 = vmul.f32 %v975, %v904
          %v1001 = vmul.f32 %v980, %v905
          %v1002 = vmul.f32 %v985, %v906
          %v1003 = vmax.f32 %v987, 0.0
          %v1004 = vmax.f32 %v988, 0.0
          %v1005 = vmax.f32 %v989, 0.0
          %v1006 = vmax.f32 %v990, 0.0
          %v1007 = vmax.f32 %v991, 0.0
          %v1008 = vmax.f32 %v992, 0.0
          %v1009 = vmax.f32 %v993, 0.0
          %v1010 = vmax.f32 %v994, 0.0
          %v1011 = vmax.f32 %v995, 0.0
          %v1012 = vmax.f32 %v996, 0.0
          %v1013 = vmax.f32 %v997, 0.0
          %v1014 = vmax.f32 %v998, 0.0
          %v1015 = vmax.f32 %v999, 0.0
          %v1016 = vmax.f32 %v1000, 0.0
          %v1017 = vmax.f32 %v1001, 0.0
          %v1018 = vmax.f32 %v1002, 0.0
          %1019 = vst [vmem:[%s333] sm:$0xff] %v1003
          %1020 = vst [vmem:[%s333 + $0x8] sm:$0xff] %v1004
          %1021 = vst [vmem:[%s333 + $0x10] sm:$0xff] %v1005
          %1022 = vst [vmem:[%s333 + $0x18] sm:$0xff] %v1006
          %1023 = vst [vmem:[%s333 + $0x20] sm:$0xff] %v1007
          %1024 = vst [vmem:[%s333 + $0x28] sm:$0xff] %v1008
          %1025 = vst [vmem:[%s333 + $0x30] sm:$0xff] %v1009
          %1026 = vst [vmem:[%s333 + $0x38] sm:$0xff] %v1010
          %1027 = vst [vmem:[%s333 + $0x40] sm:$0xff] %v1011
          %1028 = vst [vmem:[%s333 + $0x48] sm:$0xff] %v1012
          %1029 = vst [vmem:[%s333 + $0x50] sm:$0xff] %v1013
          %1030 = vst [vmem:[%s333 + $0x58] sm:$0xff] %v1014
          %1031 = vst [vmem:[%s333 + $0x60] sm:$0xff] %v1015
          %1032 = vst [vmem:[%s333 + $0x68] sm:$0xff] %v1016
          %1033 = vst [vmem:[%s333 + $0x70] sm:$0xff] %v1017
          %1034 = vst [vmem:[%s333 + $0x78] sm:$0xff] %v1018
        $region81: #{_gcn_forward_two_pass.3} parent=68 // pred_fallthru
          _
        %s1035 = smul.u32 16, %s18
        %p1036 = scmp.lt.s32.totalorder %s1035, 31
        %s1037 = scalar_select %p1036, %s1035, 31
        %s1038 = smul.addr %s1037, 8
        %s1039 = scalar_lea.vmem %s3, %s1038
        // Predicated region
        $region82: #{_gcn_forward_two_pass.3} parent=68 // pred_check
          %p1040 = pneg %p124
        $region83: #{_gcn_forward_two_pass.3} parent=68 // pred_check_branch
          %1042 = sbr.rel (%p1040) target = $region85
        $region84: #{_gcn_forward_two_pass.3} parent=68 // pred_region
          %s1043 = smul.u32 16, %s18
        $region85: #{_gcn_forward_two_pass.3} parent=68 // pred_fallthru
          _
      $region69: #{_gcn_forward_two_pass.3} parent=5 // pred_fallthru
        _
      %p1044 = scmp.le.s32.totalorder 2, %s9
      // Predicated region
      $region86: #{_gcn_forward_two_pass.3} parent=5 // pred_check
        %p1045 = pneg %p1044
      $region87: #{_gcn_forward_two_pass.3} parent=5 // pred_check_branch
        %1047 = sbr.rel (%p1045) target = $region89
      $region88: #{_gcn_forward_two_pass.3} parent=5 // pred_region
        %s1048 = ssub.s32 %s9, 2
        // Predicated region
        $region90: #{_gcn_forward_two_pass.3} parent=88 // pred_check
          %p1049 = pneg %p130
        $region91: #{_gcn_forward_two_pass.3} parent=88 // pred_check_branch
          %1051 = sbr.rel (%p1049) target = $region93
        $region92: #{_gcn_forward_two_pass.3} parent=88 // pred_region
          %s1052 = smul.u32 16, %s20
          %p1053 = scmp.lt.s32.totalorder %s1052, 31
          %s1054 = scalar_select %p1053, %s1052, 31
          %s1055 = smul.addr %s1054, 8
          %s1056 = scalar_lea.vmem %s3, %s1055
        $region93: #{_gcn_forward_two_pass.3} parent=88 // pred_fallthru
          _
      $region89: #{_gcn_forward_two_pass.3} parent=5 // pred_fallthru
        _
    $region6: #{_gcn_forward_two_pass.3} parent=1 // loop_footer
      %s13 = sadd.s32 1, %s9
    $region7: #{_gcn_forward_two_pass.3} parent=1 // loop_footer_branch
      %8 = sbr.rel target = $region3
    $region8: #{_gcn_forward_two_pass.3} parent=1 // loop_exit
      _

</llo_original>
